<compile_context>
chip_gen: v7x
topology: tpu7x:2x2x1
jax: 0.10.0
libtpu: 0.0.40
codegen_flags: <defaults>
</compile_context>

<pallas_src>
import math

import jax
import jax.numpy as jnp
from jax.experimental import pallas as pl
from jax.experimental.pallas import tpu as pltpu


def rpp_kernel(x_ref, wc_ref, scale_ref, shift_ref, sel_ref, out_ref):
    """One batch tile of B rows.

    x_ref     : (B*HW, C)       bf16  channels-last features (B batch rows flattened)
    wc_ref    : (C, P)          bf16  1x1-conv weight, transposed   (VMEM resident)
    scale_ref : (1, C)          f32   gamma / sqrt(running_var+eps) (VMEM resident)
    shift_ref : (1, C)          f32   beta - running_mean * scale   (VMEM resident)
    sel_ref   : (P, B*P, B*HW)  bf16  per-part 0/1 pooling matrices (VMEM resident)
    out_ref   : (B*P, C)        f32   pooled features, row b*P + i = (batch b, part i)
    """
    BP, _ = out_ref.shape
    P = sel_ref.shape[0]
    B = BP // P
    HW = x_ref.shape[0] // B

    x_bf = x_ref[...]                                              # (B*HW, C) bf16

    # 1x1 "conv" for the part logits: one small MXU matmul (bf16 in, f32 acc).
    logits = jnp.dot(x_bf, wc_ref[...],
                     preferred_element_type=jnp.float32)           # (B*HW, P)

    # Softmax over the 6 parts (dim=1 in NCHW == last dim here); the divide runs
    # on the EUP via the approximate reciprocal (VALU-free).
    m = jnp.max(logits, axis=-1, keepdims=True)
    e = jnp.exp(logits - m)
    p = e * pl.reciprocal(jnp.sum(e, axis=-1, keepdims=True), approx=True)

    # Fold the BN scale into x once per tile (not once per part); f32 VPU math.
    xs = x_bf.astype(jnp.float32) * scale_ref[...]                 # (B*HW, C)
    shift = shift_ref[...]                                         # (1, C)

    # Per-part BN + ReLU on the VPU; the per-batch HW reduction goes to the MXU:
    # sel_ref[i][b*P + i, b*HW:(b+1)*HW] == 1, so each dot drops the pooled sums
    # directly into their final (lane/sublane-dense) output rows.
    acc = jnp.zeros((BP, xs.shape[1]), jnp.float32)
    for i in range(P):                                             # static unroll, P == 6
        z = jnp.maximum(xs * p[:, i:i + 1] + shift, 0.0)           # BN + ReLU  (B*HW, C)
        acc = acc + jnp.dot(sel_ref[i], z.astype(jnp.bfloat16),
                            preferred_element_type=jnp.float32)    # (B*P, C)

    out_ref[...] = (acc * (1.0 / HW)).astype(out_ref.dtype)        # avgpool normalize


def rpp_forward(x_nchw, conv_w, bn_gamma, bn_beta, bn_mean, bn_var, *,
                eps=1e-5, batch_block=4):
    """RPP forward. x_nchw: (N, C, H, W). Returns (N, C, P, 1) like torch.cat(y, 2)."""
    N, C, H, W = x_nchw.shape
    P = conv_w.shape[0]
    HW = H * W
    # Batch tile: largest divisor of N that is <= batch_block (exact grid, no padding).
    # batch_block=4 is the portable default (v5e scoped VMEM with the raised limit
    # below; <=8 would also fit on v6e/v7x with bf16 x).
    B = math.gcd(N, batch_block)

    # NCHW -> channels-last (N*HW, C); the bf16 cast is fused into the transpose copy
    # so the relayout round-trips half the bytes.
    # TODO(synk): a channels-last backbone would remove this transpose entirely.
    x = jnp.transpose(x_nchw.astype(jnp.bfloat16), (0, 2, 3, 1)).reshape(N * HW, C)

    # 1x1-conv weight as (C, P) bf16 for the MXU; eval-mode BN folded to scale/shift.
    wc_t = conv_w.reshape(P, C).T.astype(jnp.bfloat16)
    scale = (bn_gamma / jnp.sqrt(bn_var + eps)).astype(jnp.float32).reshape(1, C)
    shift = (bn_beta.astype(jnp.float32).reshape(1, C)
             - bn_mean.astype(jnp.float32).reshape(1, C) * scale)

    # Per-part pooling matrices: sel[i, b*P + i, b*HW:(b+1)*HW] = 1 (0/1, exact in bf16).
    out_row = jnp.arange(B * P)
    pix_row = jnp.arange(B * HW)
    same_batch = (out_row[:, None] // P) == (pix_row[None, :] // HW)   # (B*P, B*HW)
    sel = (same_batch[None]
           & ((out_row % P)[None, :, None] == jnp.arange(P)[:, None, None]))
    sel = sel.astype(jnp.bfloat16)                                     # (P, B*P, B*HW)

    cost = pl.CostEstimate(
        flops=2 * N * HW * C * P                 # part-logit matmul
        + 2 * N * B * P * P * HW * C             # MXU pooling matmuls
        + 4 * P * N * HW * C,                    # BN/ReLU epilogue (VPU, approx)
        transcendentals=N * HW * P,              # softmax exp
        bytes_accessed=N * HW * C * 2 + N * P * C * 4 + C * P * 2 + 2 * C * 4,
    )

    out_flat = pl.pallas_call(
        rpp_kernel,
        out_shape=jax.ShapeDtypeStruct((N * P, C), jnp.float32),
        grid=(N // B,),
        in_specs=[
            pl.BlockSpec((B * HW, C), lambda n: (n, 0)),            # x: one batch tile
            pl.BlockSpec((C, P), lambda n: (0, 0)),                 # conv weight (resident)
            pl.BlockSpec((1, C), lambda n: (0, 0)),                 # BN scale    (resident)
            pl.BlockSpec((1, C), lambda n: (0, 0)),                 # BN shift    (resident)
            pl.BlockSpec((P, B * P, B * HW), lambda n: (0, 0, 0)),  # pooling mats (resident)
        ],
        out_specs=pl.BlockSpec((B * P, C), lambda n: (n, 0)),
        compiler_params=pltpu.CompilerParams(
            dimension_semantics=("parallel",),   # megacore-shard batch tiles on v7x
            # Real-model peak (C=2048, HW=192, B=4): ~6 MiB double-buffered bf16 x
            # + ~6 MiB f32 xs + ~3 MiB bf16 z + small residents ~= 16-20 MiB; raise
            # above v5e's 16 MiB scoped default, well under physical VMEM everywhere.
            vmem_limit_bytes=40 * 1024 * 1024,
        ),
        cost_estimate=cost,
    )(x, wc_t, scale, shift, sel)

    # (N*P, C) -> (N, C, P, 1) to match the PyTorch output layout (tiny transpose).
    return jnp.transpose(out_flat.reshape(N, P, C), (0, 2, 1))[:, :, :, None]


def rpp_reference(x_nchw, conv_w, bn_gamma, bn_beta, bn_mean, bn_var, eps=1e-5):
    """Pure-JAX reference of the same math.

    Mirrors the kernel's bf16 x feed and bf16-in/f32-acc logits matmul; softmax divide,
    BN/ReLU and the HW-average are kept in plain f32 (so the kernel's approx reciprocal
    and bf16 rounding of z before the MXU pooling matmul are covered by the tolerance).
    """
    N, C, H, W = x_nchw.shape
    P = conv_w.shape[0]
    x_bf = jnp.transpose(x_nchw.astype(jnp.bfloat16), (0, 2, 3, 1)).reshape(N, H * W, C)
    wc_t = conv_w.reshape(P, C).T.astype(jnp.bfloat16)
    logits = jnp.einsum("nsc,cp->nsp", x_bf, wc_t,
                        preferred_element_type=jnp.float32)           # (N, HW, P)
    m = jnp.max(logits, axis=-1, keepdims=True)
    e = jnp.exp(logits - m)
    p = e / jnp.sum(e, axis=-1, keepdims=True)

    scale = bn_gamma / jnp.sqrt(bn_var + eps)
    shift = bn_beta - bn_mean * scale
    x32 = x_bf.astype(jnp.float32)
    z = x32[:, :, None, :] * p[:, :, :, None]                         # (N, HW, P, C)
    z = jnp.maximum(z * scale + shift, 0.0)
    f = jnp.mean(z, axis=1)                                           # (N, P, C)
    return jnp.transpose(f, (0, 2, 1))[:, :, :, None]                 # (N, C, P, 1)


if __name__ == "__main__":
    # Small shapes consistent with the module (real RPP: C=2048, H*W=24*8; P=6 fixed).
    # N=8 with batch_block=4 exercises the batch-tiled grid (2 grid steps).
    N, C, H, W, P = 8, 128, 8, 8, 6

    key = jax.random.PRNGKey(0)
    kx, kw, kg, kb, km, kv = jax.random.split(key, 6)
    x = jax.random.normal(kx, (N, C, H, W), jnp.float32)
    # Conv2d(C, P, 1, bias=False) + kaiming_normal_(mode='fan_out', relu): std=sqrt(2/P).
    conv_w = jax.random.normal(kw, (P, C, 1, 1), jnp.float32) * jnp.sqrt(2.0 / P)
    # Non-trivial eval-mode BN stats so the folded scale/shift path is exercised
    # (the module's init -- gamma=1, beta=0, fresh stats -- would make BN ~identity).
    bn_gamma = 1.0 + 0.1 * jax.random.normal(kg, (C,), jnp.float32)
    bn_beta = 0.1 * jax.random.normal(kb, (C,), jnp.float32)
    bn_mean = 0.1 * jax.random.normal(km, (C,), jnp.float32)
    bn_var = jax.random.uniform(kv, (C,), jnp.float32, minval=0.5, maxval=1.5)

    fwd = jax.jit(rpp_forward)
    out = fwd(x, conv_w, bn_gamma, bn_beta, bn_mean, bn_var)
    jax.block_until_ready(out)

    ref = rpp_reference(x, conv_w, bn_gamma, bn_beta, bn_mean, bn_var)
    assert out.shape == (N, C, P, 1), out.shape
    max_err = float(jnp.max(jnp.abs(out - ref)))
    # Tolerance covers the bf16 rounding of z before the MXU pooling matmul and the
    # approximate (EUP) softmax reciprocal; the bf16 logits matmul is mirrored in ref.
    assert jnp.allclose(out, ref, atol=2e-3, rtol=2e-3), max_err

    print("KERNEL_OK")
</pallas_src>

<mosaic_0001>
module attributes {stable_mosaic.version = 11 : i64} {
  func.func @rpp_kernel(%arg0: i32, %arg1: memref<256x128xbf16, #tpu.memory_space<vmem>>, %arg2: memref<128x6xbf16, #tpu.memory_space<vmem>>, %arg3: memref<1x128xf32, #tpu.memory_space<vmem>>, %arg4: memref<1x128xf32, #tpu.memory_space<vmem>>, %arg5: memref<6x24x256xbf16, #tpu.memory_space<vmem>>, %arg6: memref<24x128xf32, #tpu.memory_space<vmem>>) attributes {dimension_semantics = [#tpu.dimension_semantics<parallel>], iteration_bounds = array<i64: 2>, scalar_prefetch = 0 : i64, scratch_operands = 0 : i64, tpu.core_type = #tpu.core_type<tc>, window_params = [{transform_indices = @transform_0, window_bounds = array<i64: 256, 128>}, {pipeline_mode = #tpu.pipeline_mode<synchronous>, transform_indices = @transform_1, window_bounds = array<i64: 128, 6>}, {pipeline_mode = #tpu.pipeline_mode<synchronous>, transform_indices = @transform_2, window_bounds = array<i64: 1, 128>}, {pipeline_mode = #tpu.pipeline_mode<synchronous>, transform_indices = @transform_3, window_bounds = array<i64: 1, 128>}, {pipeline_mode = #tpu.pipeline_mode<synchronous>, transform_indices = @transform_4, window_bounds = array<i64: 6, 24, 256>}, {transform_indices = @transform_5, window_bounds = array<i64: 24, 128>}]} {
    %c0 = arith.constant 0 : index
    %c0_0 = arith.constant 0 : index
    %0 = vector.load %arg1[%c0, %c0_0] : memref<256x128xbf16, #tpu.memory_space<vmem>>, vector<256x128xbf16>
    %c0_1 = arith.constant 0 : index
    %c0_2 = arith.constant 0 : index
    %1 = vector.load %arg2[%c0_1, %c0_2] : memref<128x6xbf16, #tpu.memory_space<vmem>>, vector<128x6xbf16>
    %cst = arith.constant dense<0.000000e+00> : vector<256x6xf32>
    %2 = tpu.matmul %0, %1, %cst {dimension_numbers = #tpu.dot_dimension_numbers<[1], [0], [0], [1], [0, 0, 1, 1], [], []>} : vector<256x128xbf16>, vector<128x6xbf16>, vector<256x6xf32> -> vector<256x6xf32>
    %cst_3 = arith.constant dense<0xFF800000> : vector<256xf32>
    %3 = vector.multi_reduction <maximumf>, %2, %cst_3 [1] : vector<256x6xf32> to vector<256xf32>
    %4 = vector.shape_cast %3 : vector<256xf32> to vector<256x1xf32>
    %5 = vector.broadcast %4 : vector<256x1xf32> to vector<256x6xf32>
    %6 = arith.subf %2, %5 : vector<256x6xf32>
    %7 = math.exp %6 : vector<256x6xf32>
    %cst_4 = arith.constant dense<0.000000e+00> : vector<256xf32>
    %8 = vector.multi_reduction <add>, %7, %cst_4 [1] : vector<256x6xf32> to vector<256xf32>
    %9 = vector.shape_cast %8 : vector<256xf32> to vector<256x1xf32>
    %10 = tpu.reciprocal %9 {approx = true} : vector<256x1xf32> -> vector<256x1xf32>
    %11 = vector.broadcast %10 : vector<256x1xf32> to vector<256x6xf32>
    %12 = arith.mulf %7, %11 : vector<256x6xf32>
    %13 = arith.extf %0 : vector<256x128xbf16> to vector<256x128xf32>
    %c0_5 = arith.constant 0 : index
    %c0_6 = arith.constant 0 : index
    %14 = vector.load %arg3[%c0_5, %c0_6] : memref<1x128xf32, #tpu.memory_space<vmem>>, vector<1x128xf32>
    %15 = vector.broadcast %14 : vector<1x128xf32> to vector<256x128xf32>
    %16 = arith.mulf %13, %15 : vector<256x128xf32>
    %c0_7 = arith.constant 0 : index
    %c0_8 = arith.constant 0 : index
    %17 = vector.load %arg4[%c0_7, %c0_8] : memref<1x128xf32, #tpu.memory_space<vmem>>, vector<1x128xf32>
    %cst_9 = arith.constant 0.000000e+00 : f32
    %18 = vector.broadcast %cst_9 : f32 to vector<24x128xf32>
    %19 = vector.extract_strided_slice %12 {offsets = [0, 0], sizes = [256, 1], strides = [1, 1]} : vector<256x6xf32> to vector<256x1xf32>
    %20 = vector.broadcast %19 : vector<256x1xf32> to vector<256x128xf32>
    %21 = arith.mulf %16, %20 : vector<256x128xf32>
    %22 = vector.broadcast %17 : vector<1x128xf32> to vector<256x128xf32>
    %23 = arith.addf %21, %22 : vector<256x128xf32>
    %cst_10 = arith.constant 0.000000e+00 : f32
    %24 = vector.broadcast %cst_10 : f32 to vector<256x128xf32>
    %25 = arith.maximumf %23, %24 : vector<256x128xf32>
    %c0_11 = arith.constant 0 : index
    %c0_12 = arith.constant 0 : index
    %c0_13 = arith.constant 0 : index
    %26 = vector.load %arg5[%c0_11, %c0_12, %c0_13] : memref<6x24x256xbf16, #tpu.memory_space<vmem>>, vector<1x24x256xbf16>
    %27 = vector.shape_cast %26 : vector<1x24x256xbf16> to vector<24x256xbf16>
    %28 = arith.truncf %25 : vector<256x128xf32> to vector<256x128xbf16>
    %cst_14 = arith.constant dense<0.000000e+00> : vector<24x128xf32>
    %29 = tpu.matmul %27, %28, %cst_14 {dimension_numbers = #tpu.dot_dimension_numbers<[1], [0], [0], [1], [0, 0, 1, 1], [], []>} : vector<24x256xbf16>, vector<256x128xbf16>, vector<24x128xf32> -> vector<24x128xf32>
    %30 = arith.addf %18, %29 : vector<24x128xf32>
    %31 = vector.extract_strided_slice %12 {offsets = [0, 1], sizes = [256, 1], strides = [1, 1]} : vector<256x6xf32> to vector<256x1xf32>
    %32 = vector.broadcast %31 : vector<256x1xf32> to vector<256x128xf32>
    %33 = arith.mulf %16, %32 : vector<256x128xf32>
    %34 = vector.broadcast %17 : vector<1x128xf32> to vector<256x128xf32>
    %35 = arith.addf %33, %34 : vector<256x128xf32>
    %cst_15 = arith.constant 0.000000e+00 : f32
    %36 = vector.broadcast %cst_15 : f32 to vector<256x128xf32>
    %37 = arith.maximumf %35, %36 : vector<256x128xf32>
    %c1 = arith.constant 1 : index
    %c0_16 = arith.constant 0 : index
    %c0_17 = arith.constant 0 : index
    %38 = vector.load %arg5[%c1, %c0_16, %c0_17] : memref<6x24x256xbf16, #tpu.memory_space<vmem>>, vector<1x24x256xbf16>
    %39 = vector.shape_cast %38 : vector<1x24x256xbf16> to vector<24x256xbf16>
    %40 = arith.truncf %37 : vector<256x128xf32> to vector<256x128xbf16>
    %cst_18 = arith.constant dense<0.000000e+00> : vector<24x128xf32>
    %41 = tpu.matmul %39, %40, %cst_18 {dimension_numbers = #tpu.dot_dimension_numbers<[1], [0], [0], [1], [0, 0, 1, 1], [], []>} : vector<24x256xbf16>, vector<256x128xbf16>, vector<24x128xf32> -> vector<24x128xf32>
    %42 = arith.addf %30, %41 : vector<24x128xf32>
    %43 = vector.extract_strided_slice %12 {offsets = [0, 2], sizes = [256, 1], strides = [1, 1]} : vector<256x6xf32> to vector<256x1xf32>
    %44 = vector.broadcast %43 : vector<256x1xf32> to vector<256x128xf32>
    %45 = arith.mulf %16, %44 : vector<256x128xf32>
    %46 = vector.broadcast %17 : vector<1x128xf32> to vector<256x128xf32>
    %47 = arith.addf %45, %46 : vector<256x128xf32>
    %cst_19 = arith.constant 0.000000e+00 : f32
    %48 = vector.broadcast %cst_19 : f32 to vector<256x128xf32>
    %49 = arith.maximumf %47, %48 : vector<256x128xf32>
    %c2 = arith.constant 2 : index
    %c0_20 = arith.constant 0 : index
    %c0_21 = arith.constant 0 : index
    %50 = vector.load %arg5[%c2, %c0_20, %c0_21] : memref<6x24x256xbf16, #tpu.memory_space<vmem>>, vector<1x24x256xbf16>
    %51 = vector.shape_cast %50 : vector<1x24x256xbf16> to vector<24x256xbf16>
    %52 = arith.truncf %49 : vector<256x128xf32> to vector<256x128xbf16>
    %cst_22 = arith.constant dense<0.000000e+00> : vector<24x128xf32>
    %53 = tpu.matmul %51, %52, %cst_22 {dimension_numbers = #tpu.dot_dimension_numbers<[1], [0], [0], [1], [0, 0, 1, 1], [], []>} : vector<24x256xbf16>, vector<256x128xbf16>, vector<24x128xf32> -> vector<24x128xf32>
    %54 = arith.addf %42, %53 : vector<24x128xf32>
    %55 = vector.extract_strided_slice %12 {offsets = [0, 3], sizes = [256, 1], strides = [1, 1]} : vector<256x6xf32> to vector<256x1xf32>
    %56 = vector.broadcast %55 : vector<256x1xf32> to vector<256x128xf32>
    %57 = arith.mulf %16, %56 : vector<256x128xf32>
    %58 = vector.broadcast %17 : vector<1x128xf32> to vector<256x128xf32>
    %59 = arith.addf %57, %58 : vector<256x128xf32>
    %cst_23 = arith.constant 0.000000e+00 : f32
    %60 = vector.broadcast %cst_23 : f32 to vector<256x128xf32>
    %61 = arith.maximumf %59, %60 : vector<256x128xf32>
    %c3 = arith.constant 3 : index
    %c0_24 = arith.constant 0 : index
    %c0_25 = arith.constant 0 : index
    %62 = vector.load %arg5[%c3, %c0_24, %c0_25] : memref<6x24x256xbf16, #tpu.memory_space<vmem>>, vector<1x24x256xbf16>
    %63 = vector.shape_cast %62 : vector<1x24x256xbf16> to vector<24x256xbf16>
    %64 = arith.truncf %61 : vector<256x128xf32> to vector<256x128xbf16>
    %cst_26 = arith.constant dense<0.000000e+00> : vector<24x128xf32>
    %65 = tpu.matmul %63, %64, %cst_26 {dimension_numbers = #tpu.dot_dimension_numbers<[1], [0], [0], [1], [0, 0, 1, 1], [], []>} : vector<24x256xbf16>, vector<256x128xbf16>, vector<24x128xf32> -> vector<24x128xf32>
    %66 = arith.addf %54, %65 : vector<24x128xf32>
    %67 = vector.extract_strided_slice %12 {offsets = [0, 4], sizes = [256, 1], strides = [1, 1]} : vector<256x6xf32> to vector<256x1xf32>
    %68 = vector.broadcast %67 : vector<256x1xf32> to vector<256x128xf32>
    %69 = arith.mulf %16, %68 : vector<256x128xf32>
    %70 = vector.broadcast %17 : vector<1x128xf32> to vector<256x128xf32>
    %71 = arith.addf %69, %70 : vector<256x128xf32>
    %cst_27 = arith.constant 0.000000e+00 : f32
    %72 = vector.broadcast %cst_27 : f32 to vector<256x128xf32>
    %73 = arith.maximumf %71, %72 : vector<256x128xf32>
    %c4 = arith.constant 4 : index
    %c0_28 = arith.constant 0 : index
    %c0_29 = arith.constant 0 : index
    %74 = vector.load %arg5[%c4, %c0_28, %c0_29] : memref<6x24x256xbf16, #tpu.memory_space<vmem>>, vector<1x24x256xbf16>
    %75 = vector.shape_cast %74 : vector<1x24x256xbf16> to vector<24x256xbf16>
    %76 = arith.truncf %73 : vector<256x128xf32> to vector<256x128xbf16>
    %cst_30 = arith.constant dense<0.000000e+00> : vector<24x128xf32>
    %77 = tpu.matmul %75, %76, %cst_30 {dimension_numbers = #tpu.dot_dimension_numbers<[1], [0], [0], [1], [0, 0, 1, 1], [], []>} : vector<24x256xbf16>, vector<256x128xbf16>, vector<24x128xf32> -> vector<24x128xf32>
    %78 = arith.addf %66, %77 : vector<24x128xf32>
    %79 = vector.extract_strided_slice %12 {offsets = [0, 5], sizes = [256, 1], strides = [1, 1]} : vector<256x6xf32> to vector<256x1xf32>
    %80 = vector.broadcast %79 : vector<256x1xf32> to vector<256x128xf32>
    %81 = arith.mulf %16, %80 : vector<256x128xf32>
    %82 = vector.broadcast %17 : vector<1x128xf32> to vector<256x128xf32>
    %83 = arith.addf %81, %82 : vector<256x128xf32>
    %cst_31 = arith.constant 0.000000e+00 : f32
    %84 = vector.broadcast %cst_31 : f32 to vector<256x128xf32>
    %85 = arith.maximumf %83, %84 : vector<256x128xf32>
    %c5 = arith.constant 5 : index
    %c0_32 = arith.constant 0 : index
    %c0_33 = arith.constant 0 : index
    %86 = vector.load %arg5[%c5, %c0_32, %c0_33] : memref<6x24x256xbf16, #tpu.memory_space<vmem>>, vector<1x24x256xbf16>
    %87 = vector.shape_cast %86 : vector<1x24x256xbf16> to vector<24x256xbf16>
    %88 = arith.truncf %85 : vector<256x128xf32> to vector<256x128xbf16>
    %cst_34 = arith.constant dense<0.000000e+00> : vector<24x128xf32>
    %89 = tpu.matmul %87, %88, %cst_34 {dimension_numbers = #tpu.dot_dimension_numbers<[1], [0], [0], [1], [0, 0, 1, 1], [], []>} : vector<24x256xbf16>, vector<256x128xbf16>, vector<24x128xf32> -> vector<24x128xf32>
    %90 = arith.addf %78, %89 : vector<24x128xf32>
    %cst_35 = arith.constant 1.562500e-02 : f32
    %91 = vector.broadcast %cst_35 : f32 to vector<24x128xf32>
    %92 = arith.mulf %90, %91 : vector<24x128xf32>
    %c0_36 = arith.constant 0 : index
    %c0_37 = arith.constant 0 : index
    %93 = vector.load %arg6[%c0_36, %c0_37] : memref<24x128xf32, #tpu.memory_space<vmem>>, vector<24x128xf32>
    tpu.vector_store %arg6[%c0_36, %c0_37], %92 {strides = array<i32>} : memref<24x128xf32, #tpu.memory_space<vmem>>, vector<24x128xf32>,
    return
  }
  func.func @transform_0(%arg0: i32) -> (i32, i32) {
    %c0_i32 = arith.constant 0 : i32
    %c0_i32_0 = arith.constant 0 : i32
    return %arg0, %c0_i32 : i32, i32
  }
  func.func @transform_1(%arg0: i32) -> (i32, i32) {
    %c0_i32 = arith.constant 0 : i32
    %c0_i32_0 = arith.constant 0 : i32
    %c0_i32_1 = arith.constant 0 : i32
    return %c0_i32, %c0_i32_0 : i32, i32
  }
  func.func @transform_2(%arg0: i32) -> (i32, i32) {
    %c0_i32 = arith.constant 0 : i32
    %c0_i32_0 = arith.constant 0 : i32
    %c0_i32_1 = arith.constant 0 : i32
    return %c0_i32, %c0_i32_0 : i32, i32
  }
  func.func @transform_3(%arg0: i32) -> (i32, i32) {
    %c0_i32 = arith.constant 0 : i32
    %c0_i32_0 = arith.constant 0 : i32
    %c0_i32_1 = arith.constant 0 : i32
    return %c0_i32, %c0_i32_0 : i32, i32
  }
  func.func @transform_4(%arg0: i32) -> (i32, i32, i32) {
    %c0_i32 = arith.constant 0 : i32
    %c0_i32_0 = arith.constant 0 : i32
    %c0_i32_1 = arith.constant 0 : i32
    %c0_i32_2 = arith.constant 0 : i32
    return %c0_i32, %c0_i32_0, %c0_i32_1 : i32, i32, i32
  }
  func.func @transform_5(%arg0: i32) -> (i32, i32) {
    %c0_i32 = arith.constant 0 : i32
    %c0_i32_0 = arith.constant 0 : i32
    return %arg0, %c0_i32 : i32, i32
  }
}

</mosaic_0001>

<llo_original>
// kernel: rpp_forward.1
$region0: #{rpp_forward.1}
  #allocation0 [shape = 'u32[]', space=smem, size = 0x4, offset = 0x4, fixed_abs, tag = 'smem constant byte address 0x4 - core index']
  #allocation1 [shape = 'u32[144,128]{1,0:T(1,128)}', space=vmem, size = 0x12000, scoped, tag = 'internal scratch']
  %s0 = inlined_call_operand.vmem [shape: bf16[512,128], index: 0, kind: input, shape index: {}]
  %s1 = inlined_call_operand.vmem [shape: bf16[128,6], index: 1, kind: input, shape index: {}]
  %s2 = inlined_call_operand.vmem [shape: f32[1,128], index: 2, kind: input, shape index: {}]
  %s3 = inlined_call_operand.vmem [shape: f32[1,128], index: 3, kind: input, shape index: {}]
  %s4 = inlined_call_operand.vmem [shape: bf16[6,24,256], index: 4, kind: input, shape index: {}]
  %s5 = inlined_call_operand.vmem [shape: f32[48,128], index: 5, kind: output, shape index: {}]
  %s6 = sld [smem:[#allocation0]]
  $region53: #{rpp_forward.1} parent=0
    _
  %s8 = ssub.s32 1, %s6
  %s9 = scalar_select 0, %s8, %s6
  loop: start=0, step=1, limit=4
  $region2: #{rpp_forward.1} parent=0 // loop_pre_header
    _
  $region3: #{rpp_forward.1} parent=0 // loop_header
    %s11 = sphi 0, %s15
    %p12 = scmp.ge.s32.totalorder %s11, 4
    %s21 = sphi 0, %s23
    %s24 = sphi 0, %s21
    %s25 = sphi 0, %s24
    %s41 = sphi 0, %s25
    %s45 = sphi 0, %s45
    %s47 = sphi 0, %s45
    %s48 = sphi 0, %s47
    %s62 = sphi 0, %s48
    %s66 = sphi 0, %s66
    %s68 = sphi 0, %s66
    %s69 = sphi 0, %s68
    %s83 = sphi 0, %s69
    %s87 = sphi 0, %s87
    %s89 = sphi 0, %s87
    %s90 = sphi 0, %s89
    %s104 = sphi 0, %s90
    %s108 = sphi 0, %s108
    %s110 = sphi 0, %s108
    %s111 = sphi 0, %s110
    %s125 = sphi 0, %s111
    %s131 = sphi 0, %s133
    %s134 = sphi 0, %s131
    %s135 = sphi 0, %s134
    %s151 = sphi 0, %s135
  $region4: #{rpp_forward.1} parent=0 // loop_header_branch
    %14 = sbr.rel (%p12) target = $region8
  $region5: #{rpp_forward.1} parent=0 // loop_body
    %s16 = ssub.s32 %s11, 1
    %s17 = ssub.s32 %s11, 2
    %s18 = sadd.s32 %s11, 1
    %s19 = ssub.s32 %s11, %s18
    %p20 = scmp.eq.s32.totalorder %s19, 0
    %s22 = sadd.s32 %s21, 1
    %s23 = scalar_select %p20, %s21, %s22
    %p26 = pneg %p20
    %p27 = scmp.eq.s32.totalorder %s11, 1
    %p28 = por %p26, %p27
    %p29 = scmp.ne.s32.totalorder %s21, %s24
    %p30 = scmp.eq.s32.totalorder %s11, 0
    %p31 = por %p29, %p30
    %p32 = scmp.ne.s32.totalorder %s21, %s24
    %p33 = scmp.eq.s32.totalorder %s16, 1
    %p34 = por %p32, %p33
    %p35 = scmp.ne.s32.totalorder %s24, %s25
    %p36 = scmp.eq.s32.totalorder %s16, 0
    %p37 = por %p35, %p36
    %p38 = scmp.ne.s32.totalorder %s24, %s25
    %p39 = scmp.eq.s32.totalorder %s17, 1
    %p40 = por %p38, %p39
    %p42 = scmp.ne.s32.totalorder %s25, %s41
    %p43 = scmp.eq.s32.totalorder %s17, 0
    %p44 = por %p42, %p43
    %s46 = sadd.s32 %s45, 1
    %p49 = scmp.eq.s32.totalorder %s11, 1
    %p50 = scmp.ne.s32.totalorder %s45, %s47
    %p51 = scmp.eq.s32.totalorder %s11, 0
    %p52 = por %p50, %p51
    %p53 = scmp.ne.s32.totalorder %s45, %s47
    %p54 = scmp.eq.s32.totalorder %s16, 1
    %p55 = por %p53, %p54
    %p56 = scmp.ne.s32.totalorder %s47, %s48
    %p57 = scmp.eq.s32.totalorder %s16, 0
    %p58 = por %p56, %p57
    %p59 = scmp.ne.s32.totalorder %s47, %s48
    %p60 = scmp.eq.s32.totalorder %s17, 1
    %p61 = por %p59, %p60
    %p63 = scmp.ne.s32.totalorder %s48, %s62
    %p64 = scmp.eq.s32.totalorder %s17, 0
    %p65 = por %p63, %p64
    %s67 = sadd.s32 %s66, 1
    %p70 = scmp.eq.s32.totalorder %s11, 1
    %p71 = scmp.ne.s32.totalorder %s66, %s68
    %p72 = scmp.eq.s32.totalorder %s11, 0
    %p73 = por %p71, %p72
    %p74 = scmp.ne.s32.totalorder %s66, %s68
    %p75 = scmp.eq.s32.totalorder %s16, 1
    %p76 = por %p74, %p75
    %p77 = scmp.ne.s32.totalorder %s68, %s69
    %p78 = scmp.eq.s32.totalorder %s16, 0
    %p79 = por %p77, %p78
    %p80 = scmp.ne.s32.totalorder %s68, %s69
    %p81 = scmp.eq.s32.totalorder %s17, 1
    %p82 = por %p80, %p81
    %p84 = scmp.ne.s32.totalorder %s69, %s83
    %p85 = scmp.eq.s32.totalorder %s17, 0
    %p86 = por %p84, %p85
    %s88 = sadd.s32 %s87, 1
    %p91 = scmp.eq.s32.totalorder %s11, 1
    %p92 = scmp.ne.s32.totalorder %s87, %s89
    %p93 = scmp.eq.s32.totalorder %s11, 0
    %p94 = por %p92, %p93
    %p95 = scmp.ne.s32.totalorder %s87, %s89
    %p96 = scmp.eq.s32.totalorder %s16, 1
    %p97 = por %p95, %p96
    %p98 = scmp.ne.s32.totalorder %s89, %s90
    %p99 = scmp.eq.s32.totalorder %s16, 0
    %p100 = por %p98, %p99
    %p101 = scmp.ne.s32.totalorder %s89, %s90
    %p102 = scmp.eq.s32.totalorder %s17, 1
    %p103 = por %p101, %p102
    %p105 = scmp.ne.s32.totalorder %s90, %s104
    %p106 = scmp.eq.s32.totalorder %s17, 0
    %p107 = por %p105, %p106
    %s109 = sadd.s32 %s108, 1
    %p112 = scmp.eq.s32.totalorder %s11, 1
    %p113 = scmp.ne.s32.totalorder %s108, %s110
    %p114 = scmp.eq.s32.totalorder %s11, 0
    %p115 = por %p113, %p114
    %p116 = scmp.ne.s32.totalorder %s108, %s110
    %p117 = scmp.eq.s32.totalorder %s16, 1
    %p118 = por %p116, %p117
    %p119 = scmp.ne.s32.totalorder %s110, %s111
    %p120 = scmp.eq.s32.totalorder %s16, 0
    %p121 = por %p119, %p120
    %p122 = scmp.ne.s32.totalorder %s110, %s111
    %p123 = scmp.eq.s32.totalorder %s17, 1
    %p124 = por %p122, %p123
    %p126 = scmp.ne.s32.totalorder %s111, %s125
    %p127 = scmp.eq.s32.totalorder %s17, 0
    %p128 = por %p126, %p127
    %s129 = ssub.s32 %s11, %s18
    %p130 = scmp.eq.s32.totalorder %s129, 0
    %s132 = sadd.s32 %s131, 1
    %s133 = scalar_select %p130, %s131, %s132
    %p136 = pneg %p130
    %p137 = scmp.eq.s32.totalorder %s11, 1
    %p138 = por %p136, %p137
    %p139 = scmp.ne.s32.totalorder %s131, %s134
    %p140 = scmp.eq.s32.totalorder %s11, 0
    %p141 = por %p139, %p140
    %p142 = scmp.ne.s32.totalorder %s131, %s134
    %p143 = scmp.eq.s32.totalorder %s16, 1
    %p144 = por %p142, %p143
    %p145 = scmp.ne.s32.totalorder %s134, %s135
    %p146 = scmp.eq.s32.totalorder %s16, 0
    %p147 = por %p145, %p146
    %p148 = scmp.ne.s32.totalorder %s134, %s135
    %p149 = scmp.eq.s32.totalorder %s17, 1
    %p150 = por %p148, %p149
    %p152 = scmp.ne.s32.totalorder %s135, %s151
    %p153 = scmp.eq.s32.totalorder %s17, 0
    %p154 = por %p152, %p153
    %p155 = scmp.le.s32.totalorder 1, %s11
    %p156 = scmp.lt.s32.totalorder %s11, 3
    %p157 = pnand %p155, %p156
    %p158 = pneg %p157
    // Predicated region
    $region9: #{rpp_forward.1} parent=5 // pred_check
      _
    $region10: #{rpp_forward.1} parent=5 // pred_check_branch
      %160 = sbr.rel (%p157) target = $region12
    $region11: #{rpp_forward.1} parent=5 // pred_region
      %s161 = ssub.s32 %s11, 1
      // Predicated region
      $region13: #{rpp_forward.1} parent=11 // pred_check
        %p162 = pneg %p58
      $region14: #{rpp_forward.1} parent=11 // pred_check_branch
        %164 = sbr.rel (%p162) target = $region16
      $region15: #{rpp_forward.1} parent=11 // pred_region
        _
      $region16: #{rpp_forward.1} parent=11 // pred_fallthru
        _
      // Predicated region
      $region17: #{rpp_forward.1} parent=11 // pred_check
        %p165 = pneg %p79
      $region18: #{rpp_forward.1} parent=11 // pred_check_branch
        %167 = sbr.rel (%p165) target = $region20
      $region19: #{rpp_forward.1} parent=11 // pred_region
        _
      $region20: #{rpp_forward.1} parent=11 // pred_fallthru
        _
      // Predicated region
      $region21: #{rpp_forward.1} parent=11 // pred_check
        %p168 = pneg %p100
      $region22: #{rpp_forward.1} parent=11 // pred_check_branch
        %170 = sbr.rel (%p168) target = $region24
      $region23: #{rpp_forward.1} parent=11 // pred_region
        _
      $region24: #{rpp_forward.1} parent=11 // pred_fallthru
        _
      // Predicated region
      $region25: #{rpp_forward.1} parent=11 // pred_check
        %p171 = pneg %p121
      $region26: #{rpp_forward.1} parent=11 // pred_check_branch
        %173 = sbr.rel (%p171) target = $region28
      $region27: #{rpp_forward.1} parent=11 // pred_region
        _
      $region28: #{rpp_forward.1} parent=11 // pred_fallthru
        _
    $region12: #{rpp_forward.1} parent=5 // pred_fallthru
      _
    %p174 = scmp.lt.s32.totalorder %s11, 2
    // Predicated region
    $region29: #{rpp_forward.1} parent=5 // pred_check
      %p175 = pneg %p174
    $region30: #{rpp_forward.1} parent=5 // pred_check_branch
      %177 = sbr.rel (%p175) target = $region32
    $region31: #{rpp_forward.1} parent=5 // pred_region
      // Predicated region
      $region33: #{rpp_forward.1} parent=31 // pred_check
        %p178 = pneg %p31
      $region34: #{rpp_forward.1} parent=31 // pred_check_branch
        %180 = sbr.rel (%p178) target = $region36
      $region35: #{rpp_forward.1} parent=31 // pred_region
        %s181 = smul.u32 32, %s11
        %p182 = scmp.lt.s32.totalorder %s181, 63
        %s183 = scalar_select %p182, %s181, 63
        %s184 = smul.addr %s183, 4
        %s185 = scalar_lea.vmem %s0, %s184
        %s186 = smul.u32 32, %s11
      $region36: #{rpp_forward.1} parent=31 // pred_fallthru
        _
    $region32: #{rpp_forward.1} parent=5 // pred_fallthru
      _
    %p187 = scmp.le.s32.totalorder 1, %s11
    %p188 = scmp.lt.s32.totalorder %s11, 3
    %p189 = pnand %p187, %p188
    %p190 = pneg %p189
    // Predicated region
    $region37: #{rpp_forward.1} parent=5 // pred_check
      _
    $region38: #{rpp_forward.1} parent=5 // pred_check_branch
      %192 = sbr.rel (%p189) target = $region40
    $region39: #{rpp_forward.1} parent=5 // pred_region
      %s193 = ssub.s32 %s11, 1
      %s194 = smul.u32 32, %s16
      %p195 = scmp.lt.s32.totalorder %s194, 63
      %s196 = scalar_select %p195, %s194, 63
      %s197 = smul.addr %s196, 4
      %s198 = scalar_lea.vmem %s0, %s197
      %p199 = pneg %p37
      %p200 = pneg %p34
      %p201 = pneg %p58
      %p202 = pneg %p55
      %p203 = pneg %p79
      %p204 = pneg %p76
      %p205 = pneg %p100
      %p206 = pneg %p97
      %p207 = pneg %p121
      %p208 = pneg %p118
      %p209 = pneg %p147
      %p210 = pneg %p144
      %s211 = smul.u32 3, %s16
      %p212 = scmp.lt.s32.totalorder %s211, 5
      %s213 = scalar_select %p212, %s211, 5
      %s214 = smul.addr %s213, 8
      %s215 = scalar_lea.vmem %s5, %s214
      %s216 = smul.u32 32, %s16
      %p217 = scmp.lt.s32.totalorder %s216, 63
      %s218 = scalar_select %p217, %s216, 63
      %s219 = smul.addr %s218, 4
      %s220 = scalar_lea.vmem %s0, %s219
      %s221 = smul.u32 32, %s16
      %s222 = smul.u32 3, %s16
      %p223 = scmp.lt.s32.totalorder %s222, 5
      %s224 = scalar_select %p223, %s222, 5
      %s225 = smul.addr %s224, 8
      %s226 = scalar_lea.vmem %s5, %s225
      %s227 = smul.u32 3, %s16
      %v229 = vld [vmem:[%s220] sm:$0xf]
      %v230 = vld [vmem:[%s220 + $0x4] sm:$0xf]
      %v231 = vld [vmem:[%s220 + $0x8] sm:$0xf]
      %v232 = vld [vmem:[%s220 + $0xc] sm:$0xf]
      %v233 = vld [vmem:[%s220 + $0x10] sm:$0xf]
      %v234 = vld [vmem:[%s220 + $0x14] sm:$0xf]
      %v235 = vld [vmem:[%s220 + $0x18] sm:$0xf]
      %v236 = vld [vmem:[%s220 + $0x1c] sm:$0xf]
      %v237 = vld [vmem:[%s220 + $0x20] sm:$0xf]
      %v238 = vld [vmem:[%s220 + $0x24] sm:$0xf]
      %v239 = vld [vmem:[%s220 + $0x28] sm:$0xf]
      %v240 = vld [vmem:[%s220 + $0x2c] sm:$0xf]
      %v241 = vld [vmem:[%s220 + $0x30] sm:$0xf]
      %v242 = vld [vmem:[%s220 + $0x34] sm:$0xf]
      %v243 = vld [vmem:[%s220 + $0x38] sm:$0xf]
      %v244 = vld [vmem:[%s220 + $0x3c] sm:$0xf]
      %v245 = vld [vmem:[%s220 + $0x40] sm:$0xf]
      %v246 = vld [vmem:[%s220 + $0x44] sm:$0xf]
      %v247 = vld [vmem:[%s220 + $0x48] sm:$0xf]
      %v248 = vld [vmem:[%s220 + $0x4c] sm:$0xf]
      %v249 = vld [vmem:[%s220 + $0x50] sm:$0xf]
      %v250 = vld [vmem:[%s220 + $0x54] sm:$0xf]
      %v251 = vld [vmem:[%s220 + $0x58] sm:$0xf]
      %v252 = vld [vmem:[%s220 + $0x5c] sm:$0xf]
      %v253 = vld [vmem:[%s220 + $0x60] sm:$0xf]
      %v254 = vld [vmem:[%s220 + $0x64] sm:$0xf]
      %v255 = vld [vmem:[%s220 + $0x68] sm:$0xf]
      %v256 = vld [vmem:[%s220 + $0x6c] sm:$0xf]
      %v257 = vld [vmem:[%s220 + $0x70] sm:$0xf]
      %v258 = vld [vmem:[%s220 + $0x74] sm:$0xf]
      %v259 = vld [vmem:[%s220 + $0x78] sm:$0xf]
      %v260 = vld [vmem:[%s220 + $0x7c] sm:$0xf]
      %v261 = vld [vmem:[%s1] sm:$0xf]
      %v262 = vld [vmem:[%s1 + $0x4] sm:$0xf]
      %v263 = vld [vmem:[%s1 + $0x8] sm:$0xf]
      %v264 = vld [vmem:[%s1 + $0xc] sm:$0xf]
      %v265 = vld [vmem:[%s1 + $0x10] sm:$0xf]
      %v266 = vld [vmem:[%s1 + $0x14] sm:$0xf]
      %v267 = vld [vmem:[%s1 + $0x18] sm:$0xf]
      %v268 = vld [vmem:[%s1 + $0x1c] sm:$0xf]
      %v269 = vld [vmem:[%s1 + $0x20] sm:$0xf]
      %v270 = vld [vmem:[%s1 + $0x24] sm:$0xf]
      %v271 = vld [vmem:[%s1 + $0x28] sm:$0xf]
      %v272 = vld [vmem:[%s1 + $0x2c] sm:$0xf]
      %v273 = vld [vmem:[%s1 + $0x30] sm:$0xf]
      %v274 = vld [vmem:[%s1 + $0x34] sm:$0xf]
      %v275 = vld [vmem:[%s1 + $0x38] sm:$0xf]
      %v276 = vld [vmem:[%s1 + $0x3c] sm:$0xf]
      %v309 = vunpack.c.l.b16 %v229
      %v310 = vunpack.c.l.b16 %v230
      %v311 = vunpack.c.l.b16 %v231
      %v312 = vunpack.c.l.b16 %v232
      %v313 = vunpack.c.l.b16 %v233
      %v314 = vunpack.c.l.b16 %v234
      %v315 = vunpack.c.l.b16 %v235
      %v316 = vunpack.c.l.b16 %v236
      %v317 = vunpack.c.l.b16 %v237
      %v318 = vunpack.c.l.b16 %v238
      %v319 = vunpack.c.l.b16 %v239
      %v320 = vunpack.c.l.b16 %v240
      %v321 = vunpack.c.l.b16 %v241
      %v322 = vunpack.c.l.b16 %v242
      %v323 = vunpack.c.l.b16 %v243
      %v324 = vunpack.c.l.b16 %v244
      %v325 = vunpack.c.l.b16 %v245
      %v326 = vunpack.c.l.b16 %v246
      %v327 = vunpack.c.l.b16 %v247
      %v328 = vunpack.c.l.b16 %v248
      %v329 = vunpack.c.l.b16 %v249
      %v330 = vunpack.c.l.b16 %v250
      %v331 = vunpack.c.l.b16 %v251
      %v332 = vunpack.c.l.b16 %v252
      %v333 = vunpack.c.l.b16 %v253
      %v334 = vunpack.c.l.b16 %v254
      %v335 = vunpack.c.l.b16 %v255
      %v336 = vunpack.c.l.b16 %v256
      %v337 = vunpack.c.l.b16 %v257
      %v338 = vunpack.c.l.b16 %v258
      %v339 = vunpack.c.l.b16 %v259
      %v340 = vunpack.c.l.b16 %v260
      %v341 = vpack.c.b16 %v310, %v309
      %v342 = vpack.c.b16 %v312, %v311
      %v343 = vpack.c.b16 %v314, %v313
      %v344 = vpack.c.b16 %v316, %v315
      %v345 = vpack.c.b16 %v318, %v317
      %v346 = vpack.c.b16 %v320, %v319
      %v347 = vpack.c.b16 %v322, %v321
      %v348 = vpack.c.b16 %v324, %v323
      %v349 = vpack.c.b16 %v326, %v325
      %v350 = vpack.c.b16 %v328, %v327
      %v351 = vpack.c.b16 %v330, %v329
      %v352 = vpack.c.b16 %v332, %v331
      %v353 = vpack.c.b16 %v334, %v333
      %v354 = vpack.c.b16 %v336, %v335
      %v355 = vpack.c.b16 %v338, %v337
      %v356 = vpack.c.b16 %v340, %v339
      %v389 = vunpack.c.l.b16 %v261
      %v390 = vunpack.c.l.b16 %v262
      %v391 = vunpack.c.l.b16 %v263
      %v392 = vunpack.c.l.b16 %v264
      %v393 = vunpack.c.l.b16 %v265
      %v394 = vunpack.c.l.b16 %v266
      %v395 = vunpack.c.l.b16 %v267
      %v396 = vunpack.c.l.b16 %v268
      %v397 = vunpack.c.l.b16 %v269
      %v398 = vunpack.c.l.b16 %v270
      %v399 = vunpack.c.l.b16 %v271
      %v400 = vunpack.c.l.b16 %v272
      %v401 = vunpack.c.l.b16 %v273
      %v402 = vunpack.c.l.b16 %v274
      %v403 = vunpack.c.l.b16 %v275
      %v404 = vunpack.c.l.b16 %v276
      %v405 = vpack.c.b16 %v390, %v389
      %v406 = vpack.c.b16 %v392, %v391
      %v407 = vpack.c.b16 %v394, %v393
      %v408 = vpack.c.b16 %v396, %v395
      %v409 = vpack.c.b16 %v398, %v397
      %v410 = vpack.c.b16 %v400, %v399
      %v411 = vpack.c.b16 %v402, %v401
      %v412 = vpack.c.b16 %v404, %v403
      %421 = vmatprep.subr.bf16.mxu0 0
      %422 = vmatpush1.bf16.msra.mxu0 %v405
      %423 = vmatprep.subr.bf16.mxu0 0
      %424 = vmatpush1.bf16.msra.mxu0 %v406
      %425 = vmatprep.subr.bf16.mxu0 0
      %426 = vmatpush1.bf16.msra.mxu0 %v407
      %427 = vmatprep.subr.bf16.mxu0 0
      %428 = vmatpush1.bf16.msra.mxu0 %v408
      %429 = vmatprep.subr.bf16.mxu0 0
      %430 = vmatpush1.bf16.msra.mxu0 %v409
      %431 = vmatprep.subr.bf16.mxu0 0
      %432 = vmatpush1.bf16.msra.mxu0 %v410
      %433 = vmatprep.subr.bf16.mxu0 0
      %434 = vmatpush1.bf16.msra.mxu0 %v411
      %435 = vmatprep.subr.bf16.mxu0 0
      %436 = vmatpush1.bf16.msra.mxu0 %v412
      %437 = vmatprep.subr.bf16.mxu0 0
      %438 = vmatpush1.bf16.msra.mxu0 0
      %439 = vmatprep.subr.bf16.mxu0 0
      %440 = vmatpush1.bf16.msra.mxu0 0
      %441 = vmatprep.subr.bf16.mxu0 0
      %442 = vmatpush1.bf16.msra.mxu0 0
      %443 = vmatprep.subr.bf16.mxu0 0
      %444 = vmatpush1.bf16.msra.mxu0 0
      %445 = vmatprep.subr.bf16.mxu0 0
      %446 = vmatpush1.bf16.msra.mxu0 0
      %447 = vmatprep.subr.bf16.mxu0 0
      %448 = vmatpush1.bf16.msra.mxu0 0
      %449 = vmatprep.subr.bf16.mxu0 0
      %450 = vmatpush1.bf16.msra.mxu0 0
      %451 = vmatprep.subr.bf16.mxu0 0
      %452 = vmatpush1.bf16.msra.mxu0 0
      %453 = vmatprep.mubr.bf16.mxu0 0
      %454 = vmatmul.mubr.bf16.gmra.mrb[0].mxu0 %v341
      %v455 = vpop.f32.mrb[0].mxu0
      %v456 = vadd.f32 0.0, %v455
      %v457 = vpop.f32.mrb[0].mxu0
      %v458 = vpop.f32.mrb[0].mxu0
      %v459 = vadd.f32 0.0, %v458
      %v460 = vpop.f32.mrb[0].mxu0
      %461 = vmatprep.mubr.bf16.mxu0 0
      %462 = vmatmul.mubr.bf16.gmra.mrb[0].mxu0 %v342
      %v463 = vpop.f32.mrb[0].mxu0
      %v464 = vadd.f32 0.0, %v463
      %v465 = vpop.f32.mrb[0].mxu0
      %v466 = vpop.f32.mrb[0].mxu0
      %v467 = vadd.f32 0.0, %v466
      %v468 = vpop.f32.mrb[0].mxu0
      %469 = vmatprep.mubr.bf16.mxu0 0
      %470 = vmatmul.mubr.bf16.gmra.mrb[0].mxu0 %v343
      %v471 = vpop.f32.mrb[0].mxu0
      %v472 = vadd.f32 0.0, %v471
      %v473 = vpop.f32.mrb[0].mxu0
      %v474 = vpop.f32.mrb[0].mxu0
      %v475 = vadd.f32 0.0, %v474
      %v476 = vpop.f32.mrb[0].mxu0
      %477 = vmatprep.mubr.bf16.mxu0 0
      %478 = vmatmul.mubr.bf16.gmra.mrb[0].mxu0 %v344
      %v479 = vpop.f32.mrb[0].mxu0
      %v480 = vadd.f32 0.0, %v479
      %v481 = vpop.f32.mrb[0].mxu0
      %v482 = vpop.f32.mrb[0].mxu0
      %v483 = vadd.f32 0.0, %v482
      %v484 = vpop.f32.mrb[0].mxu0
      %485 = vmatprep.mubr.bf16.mxu0 0
      %486 = vmatmul.mubr.bf16.gmra.mrb[0].mxu0 %v345
      %v487 = vpop.f32.mrb[0].mxu0
      %v488 = vadd.f32 0.0, %v487
      %v489 = vpop.f32.mrb[0].mxu0
      %v490 = vpop.f32.mrb[0].mxu0
      %v491 = vadd.f32 0.0, %v490
      %v492 = vpop.f32.mrb[0].mxu0
      %493 = vmatprep.mubr.bf16.mxu0 0
      %494 = vmatmul.mubr.bf16.gmra.mrb[0].mxu0 %v346
      %v495 = vpop.f32.mrb[0].mxu0
      %v496 = vadd.f32 0.0, %v495
      %v497 = vpop.f32.mrb[0].mxu0
      %v498 = vpop.f32.mrb[0].mxu0
      %v499 = vadd.f32 0.0, %v498
      %v500 = vpop.f32.mrb[0].mxu0
      %501 = vmatprep.mubr.bf16.mxu0 0
      %502 = vmatmul.mubr.bf16.gmra.mrb[0].mxu0 %v347
      %v503 = vpop.f32.mrb[0].mxu0
      %v504 = vadd.f32 0.0, %v503
      %v505 = vpop.f32.mrb[0].mxu0
      %v506 = vpop.f32.mrb[0].mxu0
      %v507 = vadd.f32 0.0, %v506
      %v508 = vpop.f32.mrb[0].mxu0
      %509 = vmatprep.mubr.bf16.mxu0 0
      %510 = vmatmul.mubr.bf16.gmra.mrb[0].mxu0 %v348
      %v511 = vpop.f32.mrb[0].mxu0
      %v512 = vadd.f32 0.0, %v511
      %v513 = vpop.f32.mrb[0].mxu0
      %v514 = vpop.f32.mrb[0].mxu0
      %v515 = vadd.f32 0.0, %v514
      %v516 = vpop.f32.mrb[0].mxu0
      %517 = vmatprep.mubr.bf16.mxu0 0
      %518 = vmatmul.mubr.bf16.gmra.mrb[0].mxu0 %v349
      %v519 = vpop.f32.mrb[0].mxu0
      %v520 = vadd.f32 0.0, %v519
      %v521 = vpop.f32.mrb[0].mxu0
      %v522 = vpop.f32.mrb[0].mxu0
      %v523 = vadd.f32 0.0, %v522
      %v524 = vpop.f32.mrb[0].mxu0
      %525 = vmatprep.mubr.bf16.mxu0 0
      %526 = vmatmul.mubr.bf16.gmra.mrb[0].mxu0 %v350
      %v527 = vpop.f32.mrb[0].mxu0
      %v528 = vadd.f32 0.0, %v527
      %v529 = vpop.f32.mrb[0].mxu0
      %v530 = vpop.f32.mrb[0].mxu0
      %v531 = vadd.f32 0.0, %v530
      %v532 = vpop.f32.mrb[0].mxu0
      %533 = vmatprep.mubr.bf16.mxu0 0
      %534 = vmatmul.mubr.bf16.gmra.mrb[0].mxu0 %v351
      %v535 = vpop.f32.mrb[0].mxu0
      %v536 = vadd.f32 0.0, %v535
      %v537 = vpop.f32.mrb[0].mxu0
      %v538 = vpop.f32.mrb[0].mxu0
      %v539 = vadd.f32 0.0, %v538
      %v540 = vpop.f32.mrb[0].mxu0
      %541 = vmatprep.mubr.bf16.mxu0 0
      %542 = vmatmul.mubr.bf16.gmra.mrb[0].mxu0 %v352
      %v543 = vpop.f32.mrb[0].mxu0
      %v544 = vadd.f32 0.0, %v543
      %v545 = vpop.f32.mrb[0].mxu0
      %v546 = vpop.f32.mrb[0].mxu0
      %v547 = vadd.f32 0.0, %v546
      %v548 = vpop.f32.mrb[0].mxu0
      %549 = vmatprep.mubr.bf16.mxu0 0
      %550 = vmatmul.mubr.bf16.gmra.mrb[0].mxu0 %v353
      %v551 = vpop.f32.mrb[0].mxu0
      %v552 = vadd.f32 0.0, %v551
      %v553 = vpop.f32.mrb[0].mxu0
      %v554 = vpop.f32.mrb[0].mxu0
      %v555 = vadd.f32 0.0, %v554
      %v556 = vpop.f32.mrb[0].mxu0
      %557 = vmatprep.mubr.bf16.mxu0 0
      %558 = vmatmul.mubr.bf16.gmra.mrb[0].mxu0 %v354
      %v559 = vpop.f32.mrb[0].mxu0
      %v560 = vadd.f32 0.0, %v559
      %v561 = vpop.f32.mrb[0].mxu0
      %v562 = vpop.f32.mrb[0].mxu0
      %v563 = vadd.f32 0.0, %v562
      %v564 = vpop.f32.mrb[0].mxu0
      %565 = vmatprep.mubr.bf16.mxu0 0
      %566 = vmatmul.mubr.bf16.gmra.mrb[0].mxu0 %v355
      %v567 = vpop.f32.mrb[0].mxu0
      %v568 = vadd.f32 0.0, %v567
      %v569 = vpop.f32.mrb[0].mxu0
      %v570 = vpop.f32.mrb[0].mxu0
      %v571 = vadd.f32 0.0, %v570
      %v572 = vpop.f32.mrb[0].mxu0
      %573 = vmatprep.mubr.bf16.mxu0 0
      %574 = vmatmul.mubr.bf16.gmra.mrb[0].mxu0 %v356
      %v575 = vpop.f32.mrb[0].mxu0
      %v576 = vadd.f32 0.0, %v575
      %v577 = vpop.f32.mrb[0].mxu0
      %v578 = vpop.f32.mrb[0].mxu0
      %v579 = vadd.f32 0.0, %v578
      %v580 = vpop.f32.mrb[0].mxu0
      %581 = vdwg.mxu0
      %vm582 = vcmask 48128
      %v583 = vsel %vm582, %v456, -inf
      %584 = vmax.xlane.f32.xlu0 %v583
      %v585 = vpop.xlane.xlu0 %584
      %v586 = vsel %vm582, %v459, -inf
      %587 = vmax.xlane.f32.xlu0 %v586
      %v588 = vpop.xlane.xlu0 %587
      %v589 = vsel %vm582, %v464, -inf
      %590 = vmax.xlane.f32.xlu0 %v589
      %v591 = vpop.xlane.xlu0 %590
      %v592 = vsel %vm582, %v467, -inf
      %593 = vmax.xlane.f32.xlu0 %v592
      %v594 = vpop.xlane.xlu0 %593
      %v595 = vsel %vm582, %v472, -inf
      %596 = vmax.xlane.f32.xlu0 %v595
      %v597 = vpop.xlane.xlu0 %596
      %v598 = vsel %vm582, %v475, -inf
      %599 = vmax.xlane.f32.xlu0 %v598
      %v600 = vpop.xlane.xlu0 %599
      %v601 = vsel %vm582, %v480, -inf
      %602 = vmax.xlane.f32.xlu0 %v601
      %v603 = vpop.xlane.xlu0 %602
      %v604 = vsel %vm582, %v483, -inf
      %605 = vmax.xlane.f32.xlu0 %v604
      %v606 = vpop.xlane.xlu0 %605
      %v607 = vsel %vm582, %v488, -inf
      %608 = vmax.xlane.f32.xlu0 %v607
      %v609 = vpop.xlane.xlu0 %608
      %v610 = vsel %vm582, %v491, -inf
      %611 = vmax.xlane.f32.xlu0 %v610
      %v612 = vpop.xlane.xlu0 %611
      %v613 = vsel %vm582, %v496, -inf
      %614 = vmax.xlane.f32.xlu0 %v613
      %v615 = vpop.xlane.xlu0 %614
      %v616 = vsel %vm582, %v499, -inf
      %617 = vmax.xlane.f32.xlu0 %v616
      %v618 = vpop.xlane.xlu0 %617
      %v619 = vsel %vm582, %v504, -inf
      %620 = vmax.xlane.f32.xlu0 %v619
      %v621 = vpop.xlane.xlu0 %620
      %v622 = vsel %vm582, %v507, -inf
      %623 = vmax.xlane.f32.xlu0 %v622
      %v624 = vpop.xlane.xlu0 %623
      %v625 = vsel %vm582, %v512, -inf
      %626 = vmax.xlane.f32.xlu0 %v625
      %v627 = vpop.xlane.xlu0 %626
      %v628 = vsel %vm582, %v515, -inf
      %629 = vmax.xlane.f32.xlu0 %v628
      %v630 = vpop.xlane.xlu0 %629
      %v631 = vsel %vm582, %v520, -inf
      %632 = vmax.xlane.f32.xlu0 %v631
      %v633 = vpop.xlane.xlu0 %632
      %v634 = vsel %vm582, %v523, -inf
      %635 = vmax.xlane.f32.xlu0 %v634
      %v636 = vpop.xlane.xlu0 %635
      %v637 = vsel %vm582, %v528, -inf
      %638 = vmax.xlane.f32.xlu0 %v637
      %v639 = vpop.xlane.xlu0 %638
      %v640 = vsel %vm582, %v531, -inf
      %641 = vmax.xlane.f32.xlu0 %v640
      %v642 = vpop.xlane.xlu0 %641
      %v643 = vsel %vm582, %v536, -inf
      %644 = vmax.xlane.f32.xlu0 %v643
      %v645 = vpop.xlane.xlu0 %644
      %v646 = vsel %vm582, %v539, -inf
      %647 = vmax.xlane.f32.xlu0 %v646
      %v648 = vpop.xlane.xlu0 %647
      %v649 = vsel %vm582, %v544, -inf
      %650 = vmax.xlane.f32.xlu0 %v649
      %v651 = vpop.xlane.xlu0 %650
      %v652 = vsel %vm582, %v547, -inf
      %653 = vmax.xlane.f32.xlu0 %v652
      %v654 = vpop.xlane.xlu0 %653
      %v655 = vsel %vm582, %v552, -inf
      %656 = vmax.xlane.f32.xlu0 %v655
      %v657 = vpop.xlane.xlu0 %656
      %v658 = vsel %vm582, %v555, -inf
      %659 = vmax.xlane.f32.xlu0 %v658
      %v660 = vpop.xlane.xlu0 %659
      %v661 = vsel %vm582, %v560, -inf
      %662 = vmax.xlane.f32.xlu0 %v661
      %v663 = vpop.xlane.xlu0 %662
      %v664 = vsel %vm582, %v563, -inf
      %665 = vmax.xlane.f32.xlu0 %v664
      %v666 = vpop.xlane.xlu0 %665
      %v667 = vsel %vm582, %v568, -inf
      %668 = vmax.xlane.f32.xlu0 %v667
      %v669 = vpop.xlane.xlu0 %668
      %v670 = vsel %vm582, %v571, -inf
      %671 = vmax.xlane.f32.xlu0 %v670
      %v672 = vpop.xlane.xlu0 %671
      %v673 = vsel %vm582, %v576, -inf
      %674 = vmax.xlane.f32.xlu0 %v673
      %v675 = vpop.xlane.xlu0 %674
      %v676 = vsel %vm582, %v579, -inf
      %677 = vmax.xlane.f32.xlu0 %v676
      %v678 = vpop.xlane.xlu0 %677
      %v679 = vsub.f32 %v456, %v585
      %v680 = vsub.f32 %v459, %v588
      %v681 = vsub.f32 %v464, %v591
      %v682 = vsub.f32 %v467, %v594
      %v683 = vsub.f32 %v472, %v597
      %v684 = vsub.f32 %v475, %v600
      %v685 = vsub.f32 %v480, %v603
      %v686 = vsub.f32 %v483, %v606
      %v687 = vsub.f32 %v488, %v609
      %v688 = vsub.f32 %v491, %v612
      %v689 = vsub.f32 %v496, %v615
      %v690 = vsub.f32 %v499, %v618
      %v691 = vsub.f32 %v504, %v621
      %v692 = vsub.f32 %v507, %v624
      %v693 = vsub.f32 %v512, %v627
      %v694 = vsub.f32 %v515, %v630
      %v695 = vsub.f32 %v520, %v633
      %v696 = vsub.f32 %v523, %v636
      %v697 = vsub.f32 %v528, %v639
      %v698 = vsub.f32 %v531, %v642
      %v699 = vsub.f32 %v536, %v645
      %v700 = vsub.f32 %v539, %v648
      %v701 = vsub.f32 %v544, %v651
      %v702 = vsub.f32 %v547, %v654
      %v703 = vsub.f32 %v552, %v657
      %v704 = vsub.f32 %v555, %v660
      %v705 = vsub.f32 %v560, %v663
      %v706 = vsub.f32 %v563, %v666
      %v707 = vsub.f32 %v568, %v669
      %v708 = vsub.f32 %v571, %v672
      %v709 = vsub.f32 %v576, %v675
      %v710 = vsub.f32 %v579, %v678
      %v711 = vmul.f32 %v679, 1.442695
      %v712 = vpow.pop %v711
      %v713 = vmul.f32 %v680, 1.442695
      %v714 = vpow.pop %v713
      %v715 = vmul.f32 %v681, 1.442695
      %v716 = vpow.pop %v715
      %v717 = vmul.f32 %v682, 1.442695
      %v718 = vpow.pop %v717
      %v719 = vmul.f32 %v683, 1.442695
      %v720 = vpow.pop %v719
      %v721 = vmul.f32 %v684, 1.442695
      %v722 = vpow.pop %v721
      %v723 = vmul.f32 %v685, 1.442695
      %v724 = vpow.pop %v723
      %v725 = vmul.f32 %v686, 1.442695
      %v726 = vpow.pop %v725
      %v727 = vmul.f32 %v687, 1.442695
      %v728 = vpow.pop %v727
      %v729 = vmul.f32 %v688, 1.442695
      %v730 = vpow.pop %v729
      %v731 = vmul.f32 %v689, 1.442695
      %v732 = vpow.pop %v731
      %v733 = vmul.f32 %v690, 1.442695
      %v734 = vpow.pop %v733
      %v735 = vmul.f32 %v691, 1.442695
      %v736 = vpow.pop %v735
      %v737 = vmul.f32 %v692, 1.442695
      %v738 = vpow.pop %v737
      %v739 = vmul.f32 %v693, 1.442695
      %v740 = vpow.pop %v739
      %v741 = vmul.f32 %v694, 1.442695
      %v742 = vpow.pop %v741
      %v743 = vmul.f32 %v695, 1.442695
      %v744 = vpow.pop %v743
      %v745 = vmul.f32 %v696, 1.442695
      %v746 = vpow.pop %v745
      %v747 = vmul.f32 %v697, 1.442695
      %v748 = vpow.pop %v747
      %v749 = vmul.f32 %v698, 1.442695
      %v750 = vpow.pop %v749
      %v751 = vmul.f32 %v699, 1.442695
      %v752 = vpow.pop %v751
      %v753 = vmul.f32 %v700, 1.442695
      %v754 = vpow.pop %v753
      %v755 = vmul.f32 %v701, 1.442695
      %v756 = vpow.pop %v755
      %v757 = vmul.f32 %v702, 1.442695
      %v758 = vpow.pop %v757
      %v759 = vmul.f32 %v703, 1.442695
      %v760 = vpow.pop %v759
      %v761 = vmul.f32 %v704, 1.442695
      %v762 = vpow.pop %v761
      %v763 = vmul.f32 %v705, 1.442695
      %v764 = vpow.pop %v763
      %v765 = vmul.f32 %v706, 1.442695
      %v766 = vpow.pop %v765
      %v767 = vmul.f32 %v707, 1.442695
      %v768 = vpow.pop %v767
      %v769 = vmul.f32 %v708, 1.442695
      %v770 = vpow.pop %v769
      %v771 = vmul.f32 %v709, 1.442695
      %v772 = vpow.pop %v771
      %v773 = vmul.f32 %v710, 1.442695
      %v774 = vpow.pop %v773
      %v775 = vsel %vm582, %v712, 0.0
      %776 = vadd.xlane.f32.xlu0 %v775
      %v777 = vpop.xlane.xlu0 %776
      %v778 = vsel %vm582, %v714, 0.0
      %779 = vadd.xlane.f32.xlu0 %v778
      %v780 = vpop.xlane.xlu0 %779
      %v781 = vsel %vm582, %v716, 0.0
      %782 = vadd.xlane.f32.xlu0 %v781
      %v783 = vpop.xlane.xlu0 %782
      %v784 = vsel %vm582, %v718, 0.0
      %785 = vadd.xlane.f32.xlu0 %v784
      %v786 = vpop.xlane.xlu0 %785
      %v787 = vsel %vm582, %v720, 0.0
      %788 = vadd.xlane.f32.xlu0 %v787
      %v789 = vpop.xlane.xlu0 %788
      %v790 = vsel %vm582, %v722, 0.0
      %791 = vadd.xlane.f32.xlu0 %v790
      %v792 = vpop.xlane.xlu0 %791
      %v793 = vsel %vm582, %v724, 0.0
      %794 = vadd.xlane.f32.xlu0 %v793
      %v795 = vpop.xlane.xlu0 %794
      %v796 = vsel %vm582, %v726, 0.0
      %797 = vadd.xlane.f32.xlu0 %v796
      %v798 = vpop.xlane.xlu0 %797
      %v799 = vsel %vm582, %v728, 0.0
      %800 = vadd.xlane.f32.xlu0 %v799
      %v801 = vpop.xlane.xlu0 %800
      %v802 = vsel %vm582, %v730, 0.0
      %803 = vadd.xlane.f32.xlu0 %v802
      %v804 = vpop.xlane.xlu0 %803
      %v805 = vsel %vm582, %v732, 0.0
      %806 = vadd.xlane.f32.xlu0 %v805
      %v807 = vpop.xlane.xlu0 %806
      %v808 = vsel %vm582, %v734, 0.0
      %809 = vadd.xlane.f32.xlu0 %v808
      %v810 = vpop.xlane.xlu0 %809
      %v811 = vsel %vm582, %v736, 0.0
      %812 = vadd.xlane.f32.xlu0 %v811
      %v813 = vpop.xlane.xlu0 %812
      %v814 = vsel %vm582, %v738, 0.0
      %815 = vadd.xlane.f32.xlu0 %v814
      %v816 = vpop.xlane.xlu0 %815
      %v817 = vsel %vm582, %v740, 0.0
      %818 = vadd.xlane.f32.xlu0 %v817
      %v819 = vpop.xlane.xlu0 %818
      %v820 = vsel %vm582, %v742, 0.0
      %821 = vadd.xlane.f32.xlu0 %v820
      %v822 = vpop.xlane.xlu0 %821
      %v823 = vsel %vm582, %v744, 0.0
      %824 = vadd.xlane.f32.xlu0 %v823
      %v825 = vpop.xlane.xlu0 %824
      %v826 = vsel %vm582, %v746, 0.0
      %827 = vadd.xlane.f32.xlu0 %v826
      %v828 = vpop.xlane.xlu0 %827
      %v829 = vsel %vm582, %v748, 0.0
      %830 = vadd.xlane.f32.xlu0 %v829
      %v831 = vpop.xlane.xlu0 %830
      %v832 = vsel %vm582, %v750, 0.0
      %833 = vadd.xlane.f32.xlu0 %v832
      %v834 = vpop.xlane.xlu0 %833
      %v835 = vsel %vm582, %v752, 0.0
      %836 = vadd.xlane.f32.xlu0 %v835
      %v837 = vpop.xlane.xlu0 %836
      %v838 = vsel %vm582, %v754, 0.0
      %839 = vadd.xlane.f32.xlu0 %v838
      %v840 = vpop.xlane.xlu0 %839
      %v841 = vsel %vm582, %v756, 0.0
      %842 = vadd.xlane.f32.xlu0 %v841
      %v843 = vpop.xlane.xlu0 %842
      %v844 = vsel %vm582, %v758, 0.0
      %845 = vadd.xlane.f32.xlu0 %v844
      %v846 = vpop.xlane.xlu0 %845
      %v847 = vsel %vm582, %v760, 0.0
      %848 = vadd.xlane.f32.xlu0 %v847
      %v849 = vpop.xlane.xlu0 %848
      %v850 = vsel %vm582, %v762, 0.0
      %851 = vadd.xlane.f32.xlu0 %v850
      %v852 = vpop.xlane.xlu0 %851
      %v853 = vsel %vm582, %v764, 0.0
      %854 = vadd.xlane.f32.xlu0 %v853
      %v855 = vpop.xlane.xlu0 %854
      %v856 = vsel %vm582, %v766, 0.0
      %857 = vadd.xlane.f32.xlu0 %v856
      %v858 = vpop.xlane.xlu0 %857
      %v859 = vsel %vm582, %v768, 0.0
      %860 = vadd.xlane.f32.xlu0 %v859
      %v861 = vpop.xlane.xlu0 %860
      %v862 = vsel %vm582, %v770, 0.0
      %863 = vadd.xlane.f32.xlu0 %v862
      %v864 = vpop.xlane.xlu0 %863
      %v865 = vsel %vm582, %v772, 0.0
      %866 = vadd.xlane.f32.xlu0 %v865
      %v867 = vpop.xlane.xlu0 %866
      %v868 = vsel %vm582, %v774, 0.0
      %869 = vadd.xlane.f32.xlu0 %v868
      %v870 = vpop.xlane.xlu0 %869
      %v871 = vrcp.pop %v777
      %v872 = vrcp.pop %v780
      %v873 = vrcp.pop %v783
      %v874 = vrcp.pop %v786
      %v875 = vrcp.pop %v789
      %v876 = vrcp.pop %v792
      %v877 = vrcp.pop %v795
      %v878 = vrcp.pop %v798
      %v879 = vrcp.pop %v801
      %v880 = vrcp.pop %v804
      %v881 = vrcp.pop %v807
      %v882 = vrcp.pop %v810
      %v883 = vrcp.pop %v813
      %v884 = vrcp.pop %v816
      %v885 = vrcp.pop %v819
      %v886 = vrcp.pop %v822
      %v887 = vrcp.pop %v825
      %v888 = vrcp.pop %v828
      %v889 = vrcp.pop %v831
      %v890 = vrcp.pop %v834
      %v891 = vrcp.pop %v837
      %v892 = vrcp.pop %v840
      %v893 = vrcp.pop %v843
      %v894 = vrcp.pop %v846
      %v895 = vrcp.pop %v849
      %v896 = vrcp.pop %v852
      %v897 = vrcp.pop %v855
      %v898 = vrcp.pop %v858
      %v899 = vrcp.pop %v861
      %v900 = vrcp.pop %v864
      %v901 = vrcp.pop %v867
      %v902 = vrcp.pop %v870
      %v903 = vmul.f32 %v712, %v871
      %v904 = vmul.f32 %v714, %v872
      %v905 = vmul.f32 %v716, %v873
      %v906 = vmul.f32 %v718, %v874
      %v907 = vmul.f32 %v720, %v875
      %v908 = vmul.f32 %v722, %v876
      %v909 = vmul.f32 %v724, %v877
      %v910 = vmul.f32 %v726, %v878
      %v911 = vmul.f32 %v728, %v879
      %v912 = vmul.f32 %v730, %v880
      %v913 = vmul.f32 %v732, %v881
      %v914 = vmul.f32 %v734, %v882
      %v915 = vmul.f32 %v736, %v883
      %v916 = vmul.f32 %v738, %v884
      %v917 = vmul.f32 %v740, %v885
      %v918 = vmul.f32 %v742, %v886
      %v919 = vmul.f32 %v744, %v887
      %v920 = vmul.f32 %v746, %v888
      %v921 = vmul.f32 %v748, %v889
      %v922 = vmul.f32 %v750, %v890
      %v923 = vmul.f32 %v752, %v891
      %v924 = vmul.f32 %v754, %v892
      %v925 = vmul.f32 %v756, %v893
      %v926 = vmul.f32 %v758, %v894
      %v927 = vmul.f32 %v760, %v895
      %v928 = vmul.f32 %v762, %v896
      %v929 = vmul.f32 %v764, %v897
      %v930 = vmul.f32 %v766, %v898
      %v931 = vmul.f32 %v768, %v899
      %v932 = vmul.f32 %v770, %v900
      %v933 = vmul.f32 %v772, %v901
      %v934 = vmul.f32 %v774, %v902
      %v935 = vunpack.c.l.bf16 %v229
      %v936 = vunpack.c.l.bf16 %v230
      %v937 = vunpack.c.l.bf16 %v231
      %v938 = vunpack.c.l.bf16 %v232
      %v939 = vunpack.c.l.bf16 %v233
      %v940 = vunpack.c.l.bf16 %v234
      %v941 = vunpack.c.l.bf16 %v235
      %v942 = vunpack.c.l.bf16 %v236
      %v943 = vunpack.c.l.bf16 %v237
      %v944 = vunpack.c.l.bf16 %v238
      %v945 = vunpack.c.l.bf16 %v239
      %v946 = vunpack.c.l.bf16 %v240
      %v947 = vunpack.c.l.bf16 %v241
      %v948 = vunpack.c.l.bf16 %v242
      %v949 = vunpack.c.l.bf16 %v243
      %v950 = vunpack.c.l.bf16 %v244
      %v951 = vunpack.c.l.bf16 %v245
      %v952 = vunpack.c.l.bf16 %v246
      %v953 = vunpack.c.l.bf16 %v247
      %v954 = vunpack.c.l.bf16 %v248
      %v955 = vunpack.c.l.bf16 %v249
      %v956 = vunpack.c.l.bf16 %v250
      %v957 = vunpack.c.l.bf16 %v251
      %v958 = vunpack.c.l.bf16 %v252
      %v959 = vunpack.c.l.bf16 %v253
      %v960 = vunpack.c.l.bf16 %v254
      %v961 = vunpack.c.l.bf16 %v255
      %v962 = vunpack.c.l.bf16 %v256
      %v963 = vunpack.c.l.bf16 %v257
      %v964 = vunpack.c.l.bf16 %v258
      %v965 = vunpack.c.l.bf16 %v259
      %v966 = vunpack.c.l.bf16 %v260
      %v967 = vld [vmem:[%s2] sm:$0x1]
      %v969 = vlaneseq
      %v970 = vshrl.u32 %v969, 7
      %v971 = vsub.s32 0, %v970
      %v972 = vrot.slane %v967, %v971
      %v974 = vmul.f32 %v935, %v972
      %v975 = vmul.f32 %v936, %v972
      %v976 = vmul.f32 %v937, %v972
      %v977 = vmul.f32 %v938, %v972
      %v978 = vmul.f32 %v939, %v972
      %v979 = vmul.f32 %v940, %v972
      %v980 = vmul.f32 %v941, %v972
      %v981 = vmul.f32 %v942, %v972
      %v982 = vmul.f32 %v943, %v972
      %v983 = vmul.f32 %v944, %v972
      %v984 = vmul.f32 %v945, %v972
      %v985 = vmul.f32 %v946, %v972
      %v986 = vmul.f32 %v947, %v972
      %v987 = vmul.f32 %v948, %v972
      %v988 = vmul.f32 %v949, %v972
      %v989 = vmul.f32 %v950, %v972
      %v990 = vmul.f32 %v951, %v972
      %v991 = vmul.f32 %v952, %v972
      %v992 = vmul.f32 %v953, %v972
      %v993 = vmul.f32 %v954, %v972
      %v994 = vmul.f32 %v955, %v972
      %v995 = vmul.f32 %v956, %v972
      %v996 = vmul.f32 %v957, %v972
      %v997 = vmul.f32 %v958, %v972
      %v998 = vmul.f32 %v959, %v972
      %v999 = vmul.f32 %v960, %v972
      %v1000 = vmul.f32 %v961, %v972
      %v1001 = vmul.f32 %v962, %v972
      %v1002 = vmul.f32 %v963, %v972
      %v1003 = vmul.f32 %v964, %v972
      %v1004 = vmul.f32 %v965, %v972
      %v1005 = vmul.f32 %v966, %v972
      %v1006 = vld [vmem:[%s3] sm:$0x1]
      %1008 = vset.pattern.permute.xlu0 0
      %1009 = vperm.xlu0 %1008, %v903
      %v1010 = vpop.permute.xlu0 %1009
      %1013 = vset.pattern.permute.xlu0 0
      %1014 = vperm.xlu0 %1013, %v904
      %v1015 = vpop.permute.xlu0 %1014
      %1018 = vset.pattern.permute.xlu0 0
      %1019 = vperm.xlu0 %1018, %v905
      %v1020 = vpop.permute.xlu0 %1019
      %1023 = vset.pattern.permute.xlu0 0
      %1024 = vperm.xlu0 %1023, %v906
      %v1025 = vpop.permute.xlu0 %1024
      %1028 = vset.pattern.permute.xlu0 0
      %1029 = vperm.xlu0 %1028, %v907
      %v1030 = vpop.permute.xlu0 %1029
      %1033 = vset.pattern.permute.xlu0 0
      %1034 = vperm.xlu0 %1033, %v908
      %v1035 = vpop.permute.xlu0 %1034
      %1038 = vset.pattern.permute.xlu0 0
      %1039 = vperm.xlu0 %1038, %v909
      %v1040 = vpop.permute.xlu0 %1039
      %1043 = vset.pattern.permute.xlu0 0
      %1044 = vperm.xlu0 %1043, %v910
      %v1045 = vpop.permute.xlu0 %1044
      %1048 = vset.pattern.permute.xlu0 0
      %1049 = vperm.xlu0 %1048, %v911
      %v1050 = vpop.permute.xlu0 %1049
      %1053 = vset.pattern.permute.xlu0 0
      %1054 = vperm.xlu0 %1053, %v912
      %v1055 = vpop.permute.xlu0 %1054
      %1058 = vset.pattern.permute.xlu0 0
      %1059 = vperm.xlu0 %1058, %v913
      %v1060 = vpop.permute.xlu0 %1059
      %1063 = vset.pattern.permute.xlu0 0
      %1064 = vperm.xlu0 %1063, %v914
      %v1065 = vpop.permute.xlu0 %1064
      %1068 = vset.pattern.permute.xlu0 0
      %1069 = vperm.xlu0 %1068, %v915
      %v1070 = vpop.permute.xlu0 %1069
      %1073 = vset.pattern.permute.xlu0 0
      %1074 = vperm.xlu0 %1073, %v916
      %v1075 = vpop.permute.xlu0 %1074
      %1078 = vset.pattern.permute.xlu0 0
      %1079 = vperm.xlu0 %1078, %v917
      %v1080 = vpop.permute.xlu0 %1079
      %1083 = vset.pattern.permute.xlu0 0
      %1084 = vperm.xlu0 %1083, %v918
      %v1085 = vpop.permute.xlu0 %1084
      %1088 = vset.pattern.permute.xlu0 0
      %1089 = vperm.xlu0 %1088, %v919
      %v1090 = vpop.permute.xlu0 %1089
      %1093 = vset.pattern.permute.xlu0 0
      %1094 = vperm.xlu0 %1093, %v920
      %v1095 = vpop.permute.xlu0 %1094
      %1098 = vset.pattern.permute.xlu0 0
      %1099 = vperm.xlu0 %1098, %v921
      %v1100 = vpop.permute.xlu0 %1099
      %1103 = vset.pattern.permute.xlu0 0
      %1104 = vperm.xlu0 %1103, %v922
      %v1105 = vpop.permute.xlu0 %1104
      %1108 = vset.pattern.permute.xlu0 0
      %1109 = vperm.xlu0 %1108, %v923
      %v1110 = vpop.permute.xlu0 %1109
      %1113 = vset.pattern.permute.xlu0 0
      %1114 = vperm.xlu0 %1113, %v924
      %v1115 = vpop.permute.xlu0 %1114
      %1118 = vset.pattern.permute.xlu0 0
      %1119 = vperm.xlu0 %1118, %v925
      %v1120 = vpop.permute.xlu0 %1119
      %1123 = vset.pattern.permute.xlu0 0
      %1124 = vperm.xlu0 %1123, %v926
      %v1125 = vpop.permute.xlu0 %1124
      %1128 = vset.pattern.permute.xlu0 0
      %1129 = vperm.xlu0 %1128, %v927
      %v1130 = vpop.permute.xlu0 %1129
      %1133 = vset.pattern.permute.xlu0 0
      %1134 = vperm.xlu0 %1133, %v928
      %v1135 = vpop.permute.xlu0 %1134
      %1138 = vset.pattern.permute.xlu0 0
      %1139 = vperm.xlu0 %1138, %v929
      %v1140 = vpop.permute.xlu0 %1139
      %1143 = vset.pattern.permute.xlu0 0
      %1144 = vperm.xlu0 %1143, %v930
      %v1145 = vpop.permute.xlu0 %1144
      %1148 = vset.pattern.permute.xlu0 0
      %1149 = vperm.xlu0 %1148, %v931
      %v1150 = vpop.permute.xlu0 %1149
      %1153 = vset.pattern.permute.xlu0 0
      %1154 = vperm.xlu0 %1153, %v932
      %v1155 = vpop.permute.xlu0 %1154
      %1158 = vset.pattern.permute.xlu0 0
      %1159 = vperm.xlu0 %1158, %v933
      %v1160 = vpop.permute.xlu0 %1159
      %1163 = vset.pattern.permute.xlu0 0
      %1164 = vperm.xlu0 %1163, %v934
      %v1165 = vpop.permute.xlu0 %1164
      %v1167 = vmul.f32 %v974, %v1010
      %v1168 = vmul.f32 %v975, %v1015
      %v1169 = vmul.f32 %v976, %v1020
      %v1170 = vmul.f32 %v977, %v1025
      %v1171 = vmul.f32 %v978, %v1030
      %v1172 = vmul.f32 %v979, %v1035
      %v1173 = vmul.f32 %v980, %v1040
      %v1174 = vmul.f32 %v981, %v1045
      %v1175 = vmul.f32 %v982, %v1050
      %v1176 = vmul.f32 %v983, %v1055
      %v1177 = vmul.f32 %v984, %v1060
      %v1178 = vmul.f32 %v985, %v1065
      %v1179 = vmul.f32 %v986, %v1070
      %v1180 = vmul.f32 %v987, %v1075
      %v1181 = vmul.f32 %v988, %v1080
      %v1182 = vmul.f32 %v989, %v1085
      %v1183 = vmul.f32 %v990, %v1090
      %v1184 = vmul.f32 %v991, %v1095
      %v1185 = vmul.f32 %v992, %v1100
      %v1186 = vmul.f32 %v993, %v1105
      %v1187 = vmul.f32 %v994, %v1110
      %v1188 = vmul.f32 %v995, %v1115
      %v1189 = vmul.f32 %v996, %v1120
      %v1190 = vmul.f32 %v997, %v1125
      %v1191 = vmul.f32 %v998, %v1130
      %v1192 = vmul.f32 %v999, %v1135
      %v1193 = vmul.f32 %v1000, %v1140
      %v1194 = vmul.f32 %v1001, %v1145
      %v1195 = vmul.f32 %v1002, %v1150
      %v1196 = vmul.f32 %v1003, %v1155
      %v1197 = vmul.f32 %v1004, %v1160
      %v1198 = vmul.f32 %v1005, %v1165
      %v1200 = vlaneseq
      %v1201 = vshrl.u32 %v1200, 7
      %v1202 = vsub.s32 0, %v1201
      %v1203 = vrot.slane %v1006, %v1202
      %v1205 = vadd.f32 %v1167, %v1203
      %v1206 = vadd.f32 %v1168, %v1203
      %v1207 = vadd.f32 %v1169, %v1203
      %v1208 = vadd.f32 %v1170, %v1203
      %v1209 = vadd.f32 %v1171, %v1203
      %v1210 = vadd.f32 %v1172, %v1203
      %v1211 = vadd.f32 %v1173, %v1203
      %v1212 = vadd.f32 %v1174, %v1203
      %v1213 = vadd.f32 %v1175, %v1203
      %v1214 = vadd.f32 %v1176, %v1203
      %v1215 = vadd.f32 %v1177, %v1203
      %v1216 = vadd.f32 %v1178, %v1203
      %v1217 = vadd.f32 %v1179, %v1203
      %v1218 = vadd.f32 %v1180, %v1203
      %v1219 = vadd.f32 %v1181, %v1203
      %v1220 = vadd.f32 %v1182, %v1203
      %v1221 = vadd.f32 %v1183, %v1203
      %v1222 = vadd.f32 %v1184, %v1203
      %v1223 = vadd.f32 %v1185, %v1203
      %v1224 = vadd.f32 %v1186, %v1203
      %v1225 = vadd.f32 %v1187, %v1203
      %v1226 = vadd.f32 %v1188, %v1203
      %v1227 = vadd.f32 %v1189, %v1203
      %v1228 = vadd.f32 %v1190, %v1203
      %v1229 = vadd.f32 %v1191, %v1203
      %v1230 = vadd.f32 %v1192, %v1203
      %v1231 = vadd.f32 %v1193, %v1203
      %v1232 = vadd.f32 %v1194, %v1203
      %v1233 = vadd.f32 %v1195, %v1203
      %v1234 = vadd.f32 %v1196, %v1203
      %v1235 = vadd.f32 %v1197, %v1203
      %v1236 = vadd.f32 %v1198, %v1203
      %v1237 = vmax.f32 %v1205, 0.0
      %v1238 = vmax.f32 %v1206, 0.0
      %v1239 = vmax.f32 %v1207, 0.0
      %v1240 = vmax.f32 %v1208, 0.0
      %v1241 = vmax.f32 %v1209, 0.0
      %v1242 = vmax.f32 %v1210, 0.0
      %v1243 = vmax.f32 %v1211, 0.0
      %v1244 = vmax.f32 %v1212, 0.0
      %v1245 = vmax.f32 %v1213, 0.0
      %v1246 = vmax.f32 %v1214, 0.0
      %v1247 = vmax.f32 %v1215, 0.0
      %v1248 = vmax.f32 %v1216, 0.0
      %v1249 = vmax.f32 %v1217, 0.0
      %v1250 = vmax.f32 %v1218, 0.0
      %v1251 = vmax.f32 %v1219, 0.0
      %v1252 = vmax.f32 %v1220, 0.0
      %v1253 = vmax.f32 %v1221, 0.0
      %v1254 = vmax.f32 %v1222, 0.0
      %v1255 = vmax.f32 %v1223, 0.0
      %v1256 = vmax.f32 %v1224, 0.0
      %v1257 = vmax.f32 %v1225, 0.0
      %v1258 = vmax.f32 %v1226, 0.0
      %v1259 = vmax.f32 %v1227, 0.0
      %v1260 = vmax.f32 %v1228, 0.0
      %v1261 = vmax.f32 %v1229, 0.0
      %v1262 = vmax.f32 %v1230, 0.0
      %v1263 = vmax.f32 %v1231, 0.0
      %v1264 = vmax.f32 %v1232, 0.0
      %v1265 = vmax.f32 %v1233, 0.0
      %v1266 = vmax.f32 %v1234, 0.0
      %v1267 = vmax.f32 %v1235, 0.0
      %v1268 = vmax.f32 %v1236, 0.0
      %v1269 = vld [vmem:[%s4] sm:$0xff]
      %v1270 = vld [vmem:[%s4 + $0x8] sm:$0xff]
      %v1271 = vld [vmem:[%s4 + $0x10] sm:$0xff]
      %v1272 = vpack.c.bf16 %v1238, %v1237
      %v1273 = vpack.c.bf16 %v1240, %v1239
      %v1274 = vpack.c.bf16 %v1242, %v1241
      %v1275 = vpack.c.bf16 %v1244, %v1243
      %v1276 = vpack.c.bf16 %v1246, %v1245
      %v1277 = vpack.c.bf16 %v1248, %v1247
      %v1278 = vpack.c.bf16 %v1250, %v1249
      %v1279 = vpack.c.bf16 %v1252, %v1251
      %v1280 = vpack.c.bf16 %v1254, %v1253
      %v1281 = vpack.c.bf16 %v1256, %v1255
      %v1282 = vpack.c.bf16 %v1258, %v1257
      %v1283 = vpack.c.bf16 %v1260, %v1259
      %v1284 = vpack.c.bf16 %v1262, %v1261
      %v1285 = vpack.c.bf16 %v1264, %v1263
      %v1286 = vpack.c.bf16 %v1266, %v1265
      %v1287 = vpack.c.bf16 %v1268, %v1267
      %1288 = vset.pattern.permute.xlu0 1
      %1289 = vperm.xlu0 %1288, %v903
      %v1290 = vpop.permute.xlu0 %1289
      %1292 = vset.pattern.permute.xlu0 1
      %1293 = vperm.xlu0 %1292, %v904
      %v1294 = vpop.permute.xlu0 %1293
      %1296 = vset.pattern.permute.xlu0 1
      %1297 = vperm.xlu0 %1296, %v905
      %v1298 = vpop.permute.xlu0 %1297
      %1300 = vset.pattern.permute.xlu0 1
      %1301 = vperm.xlu0 %1300, %v906
      %v1302 = vpop.permute.xlu0 %1301
      %1304 = vset.pattern.permute.xlu0 1
      %1305 = vperm.xlu0 %1304, %v907
      %v1306 = vpop.permute.xlu0 %1305
      %1308 = vset.pattern.permute.xlu0 1
      %1309 = vperm.xlu0 %1308, %v908
      %v1310 = vpop.permute.xlu0 %1309
      %1312 = vset.pattern.permute.xlu0 1
      %1313 = vperm.xlu0 %1312, %v909
      %v1314 = vpop.permute.xlu0 %1313
      %1316 = vset.pattern.permute.xlu0 1
      %1317 = vperm.xlu0 %1316, %v910
      %v1318 = vpop.permute.xlu0 %1317
      %1320 = vset.pattern.permute.xlu0 1
      %1321 = vperm.xlu0 %1320, %v911
      %v1322 = vpop.permute.xlu0 %1321
      %1324 = vset.pattern.permute.xlu0 1
      %1325 = vperm.xlu0 %1324, %v912
      %v1326 = vpop.permute.xlu0 %1325
      %1328 = vset.pattern.permute.xlu0 1
      %1329 = vperm.xlu0 %1328, %v913
      %v1330 = vpop.permute.xlu0 %1329
      %1332 = vset.pattern.permute.xlu0 1
      %1333 = vperm.xlu0 %1332, %v914
      %v1334 = vpop.permute.xlu0 %1333
      %1336 = vset.pattern.permute.xlu0 1
      %1337 = vperm.xlu0 %1336, %v915
      %v1338 = vpop.permute.xlu0 %1337
      %1340 = vset.pattern.permute.xlu0 1
      %1341 = vperm.xlu0 %1340, %v916
      %v1342 = vpop.permute.xlu0 %1341
      %1344 = vset.pattern.permute.xlu0 1
      %1345 = vperm.xlu0 %1344, %v917
      %v1346 = vpop.permute.xlu0 %1345
      %1348 = vset.pattern.permute.xlu0 1
      %1349 = vperm.xlu0 %1348, %v918
      %v1350 = vpop.permute.xlu0 %1349
      %1352 = vset.pattern.permute.xlu0 1
      %1353 = vperm.xlu0 %1352, %v919
      %v1354 = vpop.permute.xlu0 %1353
      %1356 = vset.pattern.permute.xlu0 1
      %1357 = vperm.xlu0 %1356, %v920
      %v1358 = vpop.permute.xlu0 %1357
      %1360 = vset.pattern.permute.xlu0 1
      %1361 = vperm.xlu0 %1360, %v921
      %v1362 = vpop.permute.xlu0 %1361
      %1364 = vset.pattern.permute.xlu0 1
      %1365 = vperm.xlu0 %1364, %v922
      %v1366 = vpop.permute.xlu0 %1365
      %1368 = vset.pattern.permute.xlu0 1
      %1369 = vperm.xlu0 %1368, %v923
      %v1370 = vpop.permute.xlu0 %1369
      %1372 = vset.pattern.permute.xlu0 1
      %1373 = vperm.xlu0 %1372, %v924
      %v1374 = vpop.permute.xlu0 %1373
      %1376 = vset.pattern.permute.xlu0 1
      %1377 = vperm.xlu0 %1376, %v925
      %v1378 = vpop.permute.xlu0 %1377
      %1380 = vset.pattern.permute.xlu0 1
      %1381 = vperm.xlu0 %1380, %v926
      %v1382 = vpop.permute.xlu0 %1381
      %1384 = vset.pattern.permute.xlu0 1
      %1385 = vperm.xlu0 %1384, %v927
      %v1386 = vpop.permute.xlu0 %1385
      %1388 = vset.pattern.permute.xlu0 1
      %1389 = vperm.xlu0 %1388, %v928
      %v1390 = vpop.permute.xlu0 %1389
      %1392 = vset.pattern.permute.xlu0 1
      %1393 = vperm.xlu0 %1392, %v929
      %v1394 = vpop.permute.xlu0 %1393
      %1396 = vset.pattern.permute.xlu0 1
      %1397 = vperm.xlu0 %1396, %v930
      %v1398 = vpop.permute.xlu0 %1397
      %1400 = vset.pattern.permute.xlu0 1
      %1401 = vperm.xlu0 %1400, %v931
      %v1402 = vpop.permute.xlu0 %1401
      %1404 = vset.pattern.permute.xlu0 1
      %1405 = vperm.xlu0 %1404, %v932
      %v1406 = vpop.permute.xlu0 %1405
      %1408 = vset.pattern.permute.xlu0 1
      %1409 = vperm.xlu0 %1408, %v933
      %v1410 = vpop.permute.xlu0 %1409
      %1412 = vset.pattern.permute.xlu0 1
      %1413 = vperm.xlu0 %1412, %v934
      %v1414 = vpop.permute.xlu0 %1413
      %v1416 = vmul.f32 %v974, %v1290
      %v1417 = vmul.f32 %v975, %v1294
      %v1418 = vmul.f32 %v976, %v1298
      %v1419 = vmul.f32 %v977, %v1302
      %v1420 = vmul.f32 %v978, %v1306
      %v1421 = vmul.f32 %v979, %v1310
      %v1422 = vmul.f32 %v980, %v1314
      %v1423 = vmul.f32 %v981, %v1318
      %v1424 = vmul.f32 %v982, %v1322
      %v1425 = vmul.f32 %v983, %v1326
      %v1426 = vmul.f32 %v984, %v1330
      %v1427 = vmul.f32 %v985, %v1334
      %v1428 = vmul.f32 %v986, %v1338
      %v1429 = vmul.f32 %v987, %v1342
      %v1430 = vmul.f32 %v988, %v1346
      %v1431 = vmul.f32 %v989, %v1350
      %v1432 = vmul.f32 %v990, %v1354
      %v1433 = vmul.f32 %v991, %v1358
      %v1434 = vmul.f32 %v992, %v1362
      %v1435 = vmul.f32 %v993, %v1366
      %v1436 = vmul.f32 %v994, %v1370
      %v1437 = vmul.f32 %v995, %v1374
      %v1438 = vmul.f32 %v996, %v1378
      %v1439 = vmul.f32 %v997, %v1382
      %v1440 = vmul.f32 %v998, %v1386
      %v1441 = vmul.f32 %v999, %v1390
      %v1442 = vmul.f32 %v1000, %v1394
      %v1443 = vmul.f32 %v1001, %v1398
      %v1444 = vmul.f32 %v1002, %v1402
      %v1445 = vmul.f32 %v1003, %v1406
      %v1446 = vmul.f32 %v1004, %v1410
      %v1447 = vmul.f32 %v1005, %v1414
      %v1448 = vadd.f32 %v1416, %v1203
      %v1449 = vadd.f32 %v1417, %v1203
      %v1450 = vadd.f32 %v1418, %v1203
      %v1451 = vadd.f32 %v1419, %v1203
      %v1452 = vadd.f32 %v1420, %v1203
      %v1453 = vadd.f32 %v1421, %v1203
      %v1454 = vadd.f32 %v1422, %v1203
      %v1455 = vadd.f32 %v1423, %v1203
      %v1456 = vadd.f32 %v1424, %v1203
      %v1457 = vadd.f32 %v1425, %v1203
      %v1458 = vadd.f32 %v1426, %v1203
      %v1459 = vadd.f32 %v1427, %v1203
      %v1460 = vadd.f32 %v1428, %v1203
      %v1461 = vadd.f32 %v1429, %v1203
      %v1462 = vadd.f32 %v1430, %v1203
      %v1463 = vadd.f32 %v1431, %v1203
      %v1464 = vadd.f32 %v1432, %v1203
      %v1465 = vadd.f32 %v1433, %v1203
      %v1466 = vadd.f32 %v1434, %v1203
      %v1467 = vadd.f32 %v1435, %v1203
      %v1468 = vadd.f32 %v1436, %v1203
      %v1469 = vadd.f32 %v1437, %v1203
      %v1470 = vadd.f32 %v1438, %v1203
      %v1471 = vadd.f32 %v1439, %v1203
      %v1472 = vadd.f32 %v1440, %v1203
      %v1473 = vadd.f32 %v1441, %v1203
      %v1474 = vadd.f32 %v1442, %v1203
      %v1475 = vadd.f32 %v1443, %v1203
      %v1476 = vadd.f32 %v1444, %v1203
      %v1477 = vadd.f32 %v1445, %v1203
      %v1478 = vadd.f32 %v1446, %v1203
      %v1479 = vadd.f32 %v1447, %v1203
      %v1480 = vmax.f32 %v1448, 0.0
      %v1481 = vmax.f32 %v1449, 0.0
      %v1482 = vmax.f32 %v1450, 0.0
      %v1483 = vmax.f32 %v1451, 0.0
      %v1484 = vmax.f32 %v1452, 0.0
      %v1485 = vmax.f32 %v1453, 0.0
      %v1486 = vmax.f32 %v1454, 0.0
      %v1487 = vmax.f32 %v1455, 0.0
      %v1488 = vmax.f32 %v1456, 0.0
      %v1489 = vmax.f32 %v1457, 0.0
      %v1490 = vmax.f32 %v1458, 0.0
      %v1491 = vmax.f32 %v1459, 0.0
      %v1492 = vmax.f32 %v1460, 0.0
      %v1493 = vmax.f32 %v1461, 0.0
      %v1494 = vmax.f32 %v1462, 0.0
      %v1495 = vmax.f32 %v1463, 0.0
      %v1496 = vmax.f32 %v1464, 0.0
      %v1497 = vmax.f32 %v1465, 0.0
      %v1498 = vmax.f32 %v1466, 0.0
      %v1499 = vmax.f32 %v1467, 0.0
      %v1500 = vmax.f32 %v1468, 0.0
      %v1501 = vmax.f32 %v1469, 0.0
      %v1502 = vmax.f32 %v1470, 0.0
      %v1503 = vmax.f32 %v1471, 0.0
      %v1504 = vmax.f32 %v1472, 0.0
      %v1505 = vmax.f32 %v1473, 0.0
      %v1506 = vmax.f32 %v1474, 0.0
      %v1507 = vmax.f32 %v1475, 0.0
      %v1508 = vmax.f32 %v1476, 0.0
      %v1509 = vmax.f32 %v1477, 0.0
      %v1510 = vmax.f32 %v1478, 0.0
      %v1511 = vmax.f32 %v1479, 0.0
      %s1512 = scalar_lea.vmem %s4, 24
      %v1513 = vld [vmem:[%s1512] sm:$0xff]
      %v1514 = vld [vmem:[%s1512 + $0x8] sm:$0xff]
      %v1515 = vld [vmem:[%s1512 + $0x10] sm:$0xff]
      %v1516 = vpack.c.bf16 %v1481, %v1480
      %v1517 = vpack.c.bf16 %v1483, %v1482
      %v1518 = vpack.c.bf16 %v1485, %v1484
      %v1519 = vpack.c.bf16 %v1487, %v1486
      %v1520 = vpack.c.bf16 %v1489, %v1488
      %v1521 = vpack.c.bf16 %v1491, %v1490
      %v1522 = vpack.c.bf16 %v1493, %v1492
      %v1523 = vpack.c.bf16 %v1495, %v1494
      %v1524 = vpack.c.bf16 %v1497, %v1496
      %v1525 = vpack.c.bf16 %v1499, %v1498
      %v1526 = vpack.c.bf16 %v1501, %v1500
      %v1527 = vpack.c.bf16 %v1503, %v1502
      %v1528 = vpack.c.bf16 %v1505, %v1504
      %v1529 = vpack.c.bf16 %v1507, %v1506
      %v1530 = vpack.c.bf16 %v1509, %v1508
      %v1531 = vpack.c.bf16 %v1511, %v1510
      %v1535 = vunpack.c.l.b16 %v1513
      %v1536 = vunpack.c.h.b16 %v1513
      %v1537 = vunpack.c.l.b16 %v1514
      %v1538 = vunpack.c.h.b16 %v1514
      %v1539 = vunpack.c.l.b16 %v1515
      %v1540 = vunpack.c.h.b16 %v1515
      %v1541 = vpack.c.b16 %v1537, %v1535
      %v1542 = vpack.c.b16 %v1538, %v1536
      %v1543 = vpack.c.b16 %v1539, %v1539
      %v1544 = vpack.c.b16 %v1540, %v1540
      %1549 = vmatprep.subr.bf16.mxu0 0
      %1550 = vmatpush1.bf16.msra.mxu0 %v1516
      %1551 = vmatprep.subr.bf16.mxu0 0
      %1552 = vmatpush1.bf16.msra.mxu0 %v1517
      %1553 = vmatprep.subr.bf16.mxu0 0
      %1554 = vmatpush1.bf16.msra.mxu0 %v1518
      %1555 = vmatprep.subr.bf16.mxu0 0
      %1556 = vmatpush1.bf16.msra.mxu0 %v1519
      %1557 = vmatprep.subr.bf16.mxu0 0
      %1558 = vmatpush1.bf16.msra.mxu0 %v1520
      %1559 = vmatprep.subr.bf16.mxu0 0
      %1560 = vmatpush1.bf16.msra.mxu0 %v1521
      %1561 = vmatprep.subr.bf16.mxu0 0
      %1562 = vmatpush1.bf16.msra.mxu0 %v1522
      %1563 = vmatprep.subr.bf16.mxu0 0
      %1564 = vmatpush1.bf16.msra.mxu0 %v1523
      %1565 = vmatprep.subr.bf16.mxu0 0
      %1566 = vmatpush1.bf16.msra.mxu0 %v1524
      %1567 = vmatprep.subr.bf16.mxu0 0
      %1568 = vmatpush1.bf16.msra.mxu0 %v1525
      %1569 = vmatprep.subr.bf16.mxu0 0
      %1570 = vmatpush1.bf16.msra.mxu0 %v1526
      %1571 = vmatprep.subr.bf16.mxu0 0
      %1572 = vmatpush1.bf16.msra.mxu0 %v1527
      %1573 = vmatprep.subr.bf16.mxu0 0
      %1574 = vmatpush1.bf16.msra.mxu0 %v1528
      %1575 = vmatprep.subr.bf16.mxu0 0
      %1576 = vmatpush1.bf16.msra.mxu0 %v1529
      %1577 = vmatprep.subr.bf16.mxu0 0
      %1578 = vmatpush1.bf16.msra.mxu0 %v1530
      %1579 = vmatprep.subr.bf16.mxu0 0
      %1580 = vmatpush1.bf16.msra.mxu0 %v1531
      %1581 = vmatprep.mubr.bf16.mxu0 %v1542
      %1582 = vmatmul.mubr.bf16.gmra.mrb[0].mxu0 %v1541
      %v1583 = vpop.f32.mrb[0].mxu0
      %v1584 = vadd.f32 0.0, %v1583
      %v1585 = vpop.f32.mrb[0].mxu0
      %v1586 = vpop.f32.mrb[0].mxu0
      %v1587 = vadd.f32 0.0, %v1586
      %v1588 = vpop.f32.mrb[0].mxu0
      %1589 = vmatprep.mubr.bf16.mxu0 %v1544
      %1590 = vmatmul.mubr.bf16.gmra.mrb[0].mxu0 %v1543
      %v1591 = vpop.f32.mrb[0].mxu0
      %v1592 = vadd.f32 0.0, %v1591
      %v1593 = vpop.f32.mrb[0].mxu0
      %v1594 = vpop.f32.mrb[0].mxu0
      %v1595 = vpop.f32.mrb[0].mxu0
      %1596 = vdwg.mxu0
      %v1600 = vunpack.c.l.b16 %v1269
      %v1601 = vunpack.c.h.b16 %v1269
      %v1602 = vunpack.c.l.b16 %v1270
      %v1603 = vunpack.c.h.b16 %v1270
      %v1604 = vunpack.c.l.b16 %v1271
      %v1605 = vunpack.c.h.b16 %v1271
      %v1606 = vpack.c.b16 %v1602, %v1600
      %v1607 = vpack.c.b16 %v1603, %v1601
      %v1608 = vpack.c.b16 %v1604, %v1604
      %v1609 = vpack.c.b16 %v1605, %v1605
      %1614 = vmatprep.subr.bf16.mxu0 0
      %1615 = vmatpush1.bf16.msra.mxu0 %v1272
      %1616 = vmatprep.subr.bf16.mxu0 0
      %1617 = vmatpush1.bf16.msra.mxu0 %v1273
      %1618 = vmatprep.subr.bf16.mxu0 0
      %1619 = vmatpush1.bf16.msra.mxu0 %v1274
      %1620 = vmatprep.subr.bf16.mxu0 0
      %1621 = vmatpush1.bf16.msra.mxu0 %v1275
      %1622 = vmatprep.subr.bf16.mxu0 0
      %1623 = vmatpush1.bf16.msra.mxu0 %v1276
      %1624 = vmatprep.subr.bf16.mxu0 0
      %1625 = vmatpush1.bf16.msra.mxu0 %v1277
      %1626 = vmatprep.subr.bf16.mxu0 0
      %1627 = vmatpush1.bf16.msra.mxu0 %v1278
      %1628 = vmatprep.subr.bf16.mxu0 0
      %1629 = vmatpush1.bf16.msra.mxu0 %v1279
      %1630 = vmatprep.subr.bf16.mxu0 0
      %1631 = vmatpush1.bf16.msra.mxu0 %v1280
      %1632 = vmatprep.subr.bf16.mxu0 0
      %1633 = vmatpush1.bf16.msra.mxu0 %v1281
      %1634 = vmatprep.subr.bf16.mxu0 0
      %1635 = vmatpush1.bf16.msra.mxu0 %v1282
      %1636 = vmatprep.subr.bf16.mxu0 0
      %1637 = vmatpush1.bf16.msra.mxu0 %v1283
      %1638 = vmatprep.subr.bf16.mxu0 0
      %1639 = vmatpush1.bf16.msra.mxu0 %v1284
      %1640 = vmatprep.subr.bf16.mxu0 0
      %1641 = vmatpush1.bf16.msra.mxu0 %v1285
      %1642 = vmatprep.subr.bf16.mxu0 0
      %1643 = vmatpush1.bf16.msra.mxu0 %v1286
      %1644 = vmatprep.subr.bf16.mxu0 0
      %1645 = vmatpush1.bf16.msra.mxu0 %v1287
      %1646 = vmatprep.mubr.bf16.mxu0 %v1607
      %1647 = vmatmul.mubr.bf16.gmra.mrb[0].mxu0 %v1606
      %v1648 = vpop.f32.mrb[0].mxu0
      %v1649 = vadd.f32 %v1584, %v1648
      %v1650 = vpop.f32.mrb[0].mxu0
      %v1651 = vpop.f32.mrb[0].mxu0
      %v1652 = vadd.f32 %v1587, %v1651
      %v1653 = vpop.f32.mrb[0].mxu0
      %1654 = vmatprep.mubr.bf16.mxu0 %v1609
      %1655 = vmatmul.mubr.bf16.gmra.mrb[0].mxu0 %v1608
      %v1656 = vpop.f32.mrb[0].mxu0
      %v1657 = vadd.f32 %v1592, %v1656
      %v1658 = vpop.f32.mrb[0].mxu0
      %v1659 = vpop.f32.mrb[0].mxu0
      %v1660 = vpop.f32.mrb[0].mxu0
      %1661 = vdwg.mxu0
      %1662 = vset.pattern.permute.xlu0 2
      %1663 = vperm.xlu0 %1662, %v903
      %v1664 = vpop.permute.xlu0 %1663
      %1666 = vset.pattern.permute.xlu0 2
      %1667 = vperm.xlu0 %1666, %v904
      %v1668 = vpop.permute.xlu0 %1667
      %1670 = vset.pattern.permute.xlu0 2
      %1671 = vperm.xlu0 %1670, %v905
      %v1672 = vpop.permute.xlu0 %1671
      %1674 = vset.pattern.permute.xlu0 2
      %1675 = vperm.xlu0 %1674, %v906
      %v1676 = vpop.permute.xlu0 %1675
      %1678 = vset.pattern.permute.xlu0 2
      %1679 = vperm.xlu0 %1678, %v907
      %v1680 = vpop.permute.xlu0 %1679
      %1682 = vset.pattern.permute.xlu0 2
      %1683 = vperm.xlu0 %1682, %v908
      %v1684 = vpop.permute.xlu0 %1683
      %1686 = vset.pattern.permute.xlu0 2
      %1687 = vperm.xlu0 %1686, %v909
      %v1688 = vpop.permute.xlu0 %1687
      %1690 = vset.pattern.permute.xlu0 2
      %1691 = vperm.xlu0 %1690, %v910
      %v1692 = vpop.permute.xlu0 %1691
      %1694 = vset.pattern.permute.xlu0 2
      %1695 = vperm.xlu0 %1694, %v911
      %v1696 = vpop.permute.xlu0 %1695
      %1698 = vset.pattern.permute.xlu0 2
      %1699 = vperm.xlu0 %1698, %v912
      %v1700 = vpop.permute.xlu0 %1699
      %1702 = vset.pattern.permute.xlu0 2
      %1703 = vperm.xlu0 %1702, %v913
      %v1704 = vpop.permute.xlu0 %1703
      %1706 = vset.pattern.permute.xlu0 2
      %1707 = vperm.xlu0 %1706, %v914
      %v1708 = vpop.permute.xlu0 %1707
      %1710 = vset.pattern.permute.xlu0 2
      %1711 = vperm.xlu0 %1710, %v915
      %v1712 = vpop.permute.xlu0 %1711
      %1714 = vset.pattern.permute.xlu0 2
      %1715 = vperm.xlu0 %1714, %v916
      %v1716 = vpop.permute.xlu0 %1715
      %1718 = vset.pattern.permute.xlu0 2
      %1719 = vperm.xlu0 %1718, %v917
      %v1720 = vpop.permute.xlu0 %1719
      %1722 = vset.pattern.permute.xlu0 2
      %1723 = vperm.xlu0 %1722, %v918
      %v1724 = vpop.permute.xlu0 %1723
      %1726 = vset.pattern.permute.xlu0 2
      %1727 = vperm.xlu0 %1726, %v919
      %v1728 = vpop.permute.xlu0 %1727
      %1730 = vset.pattern.permute.xlu0 2
      %1731 = vperm.xlu0 %1730, %v920
      %v1732 = vpop.permute.xlu0 %1731
      %1734 = vset.pattern.permute.xlu0 2
      %1735 = vperm.xlu0 %1734, %v921
      %v1736 = vpop.permute.xlu0 %1735
      %1738 = vset.pattern.permute.xlu0 2
      %1739 = vperm.xlu0 %1738, %v922
      %v1740 = vpop.permute.xlu0 %1739
      %1742 = vset.pattern.permute.xlu0 2
      %1743 = vperm.xlu0 %1742, %v923
      %v1744 = vpop.permute.xlu0 %1743
      %1746 = vset.pattern.permute.xlu0 2
      %1747 = vperm.xlu0 %1746, %v924
      %v1748 = vpop.permute.xlu0 %1747
      %1750 = vset.pattern.permute.xlu0 2
      %1751 = vperm.xlu0 %1750, %v925
      %v1752 = vpop.permute.xlu0 %1751
      %1754 = vset.pattern.permute.xlu0 2
      %1755 = vperm.xlu0 %1754, %v926
      %v1756 = vpop.permute.xlu0 %1755
      %1758 = vset.pattern.permute.xlu0 2
      %1759 = vperm.xlu0 %1758, %v927
      %v1760 = vpop.permute.xlu0 %1759
      %1762 = vset.pattern.permute.xlu0 2
      %1763 = vperm.xlu0 %1762, %v928
      %v1764 = vpop.permute.xlu0 %1763
      %1766 = vset.pattern.permute.xlu0 2
      %1767 = vperm.xlu0 %1766, %v929
      %v1768 = vpop.permute.xlu0 %1767
      %1770 = vset.pattern.permute.xlu0 2
      %1771 = vperm.xlu0 %1770, %v930
      %v1772 = vpop.permute.xlu0 %1771
      %1774 = vset.pattern.permute.xlu0 2
      %1775 = vperm.xlu0 %1774, %v931
      %v1776 = vpop.permute.xlu0 %1775
      %1778 = vset.pattern.permute.xlu0 2
      %1779 = vperm.xlu0 %1778, %v932
      %v1780 = vpop.permute.xlu0 %1779
      %1782 = vset.pattern.permute.xlu0 2
      %1783 = vperm.xlu0 %1782, %v933
      %v1784 = vpop.permute.xlu0 %1783
      %1786 = vset.pattern.permute.xlu0 2
      %1787 = vperm.xlu0 %1786, %v934
      %v1788 = vpop.permute.xlu0 %1787
      %v1790 = vmul.f32 %v974, %v1664
      %v1791 = vmul.f32 %v975, %v1668
      %v1792 = vmul.f32 %v976, %v1672
      %v1793 = vmul.f32 %v977, %v1676
      %v1794 = vmul.f32 %v978, %v1680
      %v1795 = vmul.f32 %v979, %v1684
      %v1796 = vmul.f32 %v980, %v1688
      %v1797 = vmul.f32 %v981, %v1692
      %v1798 = vmul.f32 %v982, %v1696
      %v1799 = vmul.f32 %v983, %v1700
      %v1800 = vmul.f32 %v984, %v1704
      %v1801 = vmul.f32 %v985, %v1708
      %v1802 = vmul.f32 %v986, %v1712
      %v1803 = vmul.f32 %v987, %v1716
      %v1804 = vmul.f32 %v988, %v1720
      %v1805 = vmul.f32 %v989, %v1724
      %v1806 = vmul.f32 %v990, %v1728
      %v1807 = vmul.f32 %v991, %v1732
      %v1808 = vmul.f32 %v992, %v1736
      %v1809 = vmul.f32 %v993, %v1740
      %v1810 = vmul.f32 %v994, %v1744
      %v1811 = vmul.f32 %v995, %v1748
      %v1812 = vmul.f32 %v996, %v1752
      %v1813 = vmul.f32 %v997, %v1756
      %v1814 = vmul.f32 %v998, %v1760
      %v1815 = vmul.f32 %v999, %v1764
      %v1816 = vmul.f32 %v1000, %v1768
      %v1817 = vmul.f32 %v1001, %v1772
      %v1818 = vmul.f32 %v1002, %v1776
      %v1819 = vmul.f32 %v1003, %v1780
      %v1820 = vmul.f32 %v1004, %v1784
      %v1821 = vmul.f32 %v1005, %v1788
      %v1822 = vadd.f32 %v1790, %v1203
      %v1823 = vadd.f32 %v1791, %v1203
      %v1824 = vadd.f32 %v1792, %v1203
      %v1825 = vadd.f32 %v1793, %v1203
      %v1826 = vadd.f32 %v1794, %v1203
      %v1827 = vadd.f32 %v1795, %v1203
      %v1828 = vadd.f32 %v1796, %v1203
      %v1829 = vadd.f32 %v1797, %v1203
      %v1830 = vadd.f32 %v1798, %v1203
      %v1831 = vadd.f32 %v1799, %v1203
      %v1832 = vadd.f32 %v1800, %v1203
      %v1833 = vadd.f32 %v1801, %v1203
      %v1834 = vadd.f32 %v1802, %v1203
      %v1835 = vadd.f32 %v1803, %v1203
      %v1836 = vadd.f32 %v1804, %v1203
      %v1837 = vadd.f32 %v1805, %v1203
      %v1838 = vadd.f32 %v1806, %v1203
      %v1839 = vadd.f32 %v1807, %v1203
      %v1840 = vadd.f32 %v1808, %v1203
      %v1841 = vadd.f32 %v1809, %v1203
      %v1842 = vadd.f32 %v1810, %v1203
      %v1843 = vadd.f32 %v1811, %v1203
      %v1844 = vadd.f32 %v1812, %v1203
      %v1845 = vadd.f32 %v1813, %v1203
      %v1846 = vadd.f32 %v1814, %v1203
      %v1847 = vadd.f32 %v1815, %v1203
      %v1848 = vadd.f32 %v1816, %v1203
      %v1849 = vadd.f32 %v1817, %v1203
      %v1850 = vadd.f32 %v1818, %v1203
      %v1851 = vadd.f32 %v1819, %v1203
      %v1852 = vadd.f32 %v1820, %v1203
      %v1853 = vadd.f32 %v1821, %v1203
      %v1854 = vmax.f32 %v1822, 0.0
      %v1855 = vmax.f32 %v1823, 0.0
      %v1856 = vmax.f32 %v1824, 0.0
      %v1857 = vmax.f32 %v1825, 0.0
      %v1858 = vmax.f32 %v1826, 0.0
      %v1859 = vmax.f32 %v1827, 0.0
      %v1860 = vmax.f32 %v1828, 0.0
      %v1861 = vmax.f32 %v1829, 0.0
      %v1862 = vmax.f32 %v1830, 0.0
      %v1863 = vmax.f32 %v1831, 0.0
      %v1864 = vmax.f32 %v1832, 0.0
      %v1865 = vmax.f32 %v1833, 0.0
      %v1866 = vmax.f32 %v1834, 0.0
      %v1867 = vmax.f32 %v1835, 0.0
      %v1868 = vmax.f32 %v1836, 0.0
      %v1869 = vmax.f32 %v1837, 0.0
      %v1870 = vmax.f32 %v1838, 0.0
      %v1871 = vmax.f32 %v1839, 0.0
      %v1872 = vmax.f32 %v1840, 0.0
      %v1873 = vmax.f32 %v1841, 0.0
      %v1874 = vmax.f32 %v1842, 0.0
      %v1875 = vmax.f32 %v1843, 0.0
      %v1876 = vmax.f32 %v1844, 0.0
      %v1877 = vmax.f32 %v1845, 0.0
      %v1878 = vmax.f32 %v1846, 0.0
      %v1879 = vmax.f32 %v1847, 0.0
      %v1880 = vmax.f32 %v1848, 0.0
      %v1881 = vmax.f32 %v1849, 0.0
      %v1882 = vmax.f32 %v1850, 0.0
      %v1883 = vmax.f32 %v1851, 0.0
      %v1884 = vmax.f32 %v1852, 0.0
      %v1885 = vmax.f32 %v1853, 0.0
      %s1886 = scalar_lea.vmem %s4, 48
      %v1887 = vld [vmem:[%s1886] sm:$0xff]
      %v1888 = vld [vmem:[%s1886 + $0x8] sm:$0xff]
      %v1889 = vld [vmem:[%s1886 + $0x10] sm:$0xff]
      %v1890 = vpack.c.bf16 %v1855, %v1854
      %v1891 = vpack.c.bf16 %v1857, %v1856
      %v1892 = vpack.c.bf16 %v1859, %v1858
      %v1893 = vpack.c.bf16 %v1861, %v1860
      %v1894 = vpack.c.bf16 %v1863, %v1862
      %v1895 = vpack.c.bf16 %v1865, %v1864
      %v1896 = vpack.c.bf16 %v1867, %v1866
      %v1897 = vpack.c.bf16 %v1869, %v1868
      %v1898 = vpack.c.bf16 %v1871, %v1870
      %v1899 = vpack.c.bf16 %v1873, %v1872
      %v1900 = vpack.c.bf16 %v1875, %v1874
      %v1901 = vpack.c.bf16 %v1877, %v1876
      %v1902 = vpack.c.bf16 %v1879, %v1878
      %v1903 = vpack.c.bf16 %v1881, %v1880
      %v1904 = vpack.c.bf16 %v1883, %v1882
      %v1905 = vpack.c.bf16 %v1885, %v1884
      %v1909 = vunpack.c.l.b16 %v1887
      %v1910 = vunpack.c.h.b16 %v1887
      %v1911 = vunpack.c.l.b16 %v1888
      %v1912 = vunpack.c.h.b16 %v1888
      %v1913 = vunpack.c.l.b16 %v1889
      %v1914 = vunpack.c.h.b16 %v1889
      %v1915 = vpack.c.b16 %v1911, %v1909
      %v1916 = vpack.c.b16 %v1912, %v1910
      %v1917 = vpack.c.b16 %v1913, %v1913
      %v1918 = vpack.c.b16 %v1914, %v1914
      %1923 = vmatprep.subr.bf16.mxu0 0
      %1924 = vmatpush1.bf16.msra.mxu0 %v1890
      %1925 = vmatprep.subr.bf16.mxu0 0
      %1926 = vmatpush1.bf16.msra.mxu0 %v1891
      %1927 = vmatprep.subr.bf16.mxu0 0
      %1928 = vmatpush1.bf16.msra.mxu0 %v1892
      %1929 = vmatprep.subr.bf16.mxu0 0
      %1930 = vmatpush1.bf16.msra.mxu0 %v1893
      %1931 = vmatprep.subr.bf16.mxu0 0
      %1932 = vmatpush1.bf16.msra.mxu0 %v1894
      %1933 = vmatprep.subr.bf16.mxu0 0
      %1934 = vmatpush1.bf16.msra.mxu0 %v1895
      %1935 = vmatprep.subr.bf16.mxu0 0
      %1936 = vmatpush1.bf16.msra.mxu0 %v1896
      %1937 = vmatprep.subr.bf16.mxu0 0
      %1938 = vmatpush1.bf16.msra.mxu0 %v1897
      %1939 = vmatprep.subr.bf16.mxu0 0
      %1940 = vmatpush1.bf16.msra.mxu0 %v1898
      %1941 = vmatprep.subr.bf16.mxu0 0
      %1942 = vmatpush1.bf16.msra.mxu0 %v1899
      %1943 = vmatprep.subr.bf16.mxu0 0
      %1944 = vmatpush1.bf16.msra.mxu0 %v1900
      %1945 = vmatprep.subr.bf16.mxu0 0
      %1946 = vmatpush1.bf16.msra.mxu0 %v1901
      %1947 = vmatprep.subr.bf16.mxu0 0
      %1948 = vmatpush1.bf16.msra.mxu0 %v1902
      %1949 = vmatprep.subr.bf16.mxu0 0
      %1950 = vmatpush1.bf16.msra.mxu0 %v1903
      %1951 = vmatprep.subr.bf16.mxu0 0
      %1952 = vmatpush1.bf16.msra.mxu0 %v1904
      %1953 = vmatprep.subr.bf16.mxu0 0
      %1954 = vmatpush1.bf16.msra.mxu0 %v1905
      %1955 = vmatprep.mubr.bf16.mxu0 %v1916
      %1956 = vmatmul.mubr.bf16.gmra.mrb[0].mxu0 %v1915
      %v1957 = vpop.f32.mrb[0].mxu0
      %v1958 = vadd.f32 0.0, %v1957
      %v1959 = vpop.f32.mrb[0].mxu0
      %v1960 = vpop.f32.mrb[0].mxu0
      %v1961 = vadd.f32 0.0, %v1960
      %v1962 = vpop.f32.mrb[0].mxu0
      %1963 = vmatprep.mubr.bf16.mxu0 %v1918
      %1964 = vmatmul.mubr.bf16.gmra.mrb[0].mxu0 %v1917
      %v1965 = vpop.f32.mrb[0].mxu0
      %v1966 = vadd.f32 0.0, %v1965
      %v1967 = vpop.f32.mrb[0].mxu0
      %v1968 = vpop.f32.mrb[0].mxu0
      %v1969 = vpop.f32.mrb[0].mxu0
      %1970 = vdwg.mxu0
      %v1971 = vadd.f32 %v1649, %v1958
      %v1972 = vadd.f32 %v1652, %v1961
      %v1973 = vadd.f32 %v1657, %v1966
      %1974 = vset.pattern.permute.xlu0 3
      %1975 = vperm.xlu0 %1974, %v903
      %v1976 = vpop.permute.xlu0 %1975
      %1978 = vset.pattern.permute.xlu0 3
      %1979 = vperm.xlu0 %1978, %v904
      %v1980 = vpop.permute.xlu0 %1979
      %1982 = vset.pattern.permute.xlu0 3
      %1983 = vperm.xlu0 %1982, %v905
      %v1984 = vpop.permute.xlu0 %1983
      %1986 = vset.pattern.permute.xlu0 3
      %1987 = vperm.xlu0 %1986, %v906
      %v1988 = vpop.permute.xlu0 %1987
      %1990 = vset.pattern.permute.xlu0 3
      %1991 = vperm.xlu0 %1990, %v907
      %v1992 = vpop.permute.xlu0 %1991
      %1994 = vset.pattern.permute.xlu0 3
      %1995 = vperm.xlu0 %1994, %v908
      %v1996 = vpop.permute.xlu0 %1995
      %1998 = vset.pattern.permute.xlu0 3
      %1999 = vperm.xlu0 %1998, %v909
      %v2000 = vpop.permute.xlu0 %1999
      %2002 = vset.pattern.permute.xlu0 3
      %2003 = vperm.xlu0 %2002, %v910
      %v2004 = vpop.permute.xlu0 %2003
      %2006 = vset.pattern.permute.xlu0 3
      %2007 = vperm.xlu0 %2006, %v911
      %v2008 = vpop.permute.xlu0 %2007
      %2010 = vset.pattern.permute.xlu0 3
      %2011 = vperm.xlu0 %2010, %v912
      %v2012 = vpop.permute.xlu0 %2011
      %2014 = vset.pattern.permute.xlu0 3
      %2015 = vperm.xlu0 %2014, %v913
      %v2016 = vpop.permute.xlu0 %2015
      %2018 = vset.pattern.permute.xlu0 3
      %2019 = vperm.xlu0 %2018, %v914
      %v2020 = vpop.permute.xlu0 %2019
      %2022 = vset.pattern.permute.xlu0 3
      %2023 = vperm.xlu0 %2022, %v915
      %v2024 = vpop.permute.xlu0 %2023
      %2026 = vset.pattern.permute.xlu0 3
      %2027 = vperm.xlu0 %2026, %v916
      %v2028 = vpop.permute.xlu0 %2027
      %2030 = vset.pattern.permute.xlu0 3
      %2031 = vperm.xlu0 %2030, %v917
      %v2032 = vpop.permute.xlu0 %2031
      %2034 = vset.pattern.permute.xlu0 3
      %2035 = vperm.xlu0 %2034, %v918
      %v2036 = vpop.permute.xlu0 %2035
      %2038 = vset.pattern.permute.xlu0 3
      %2039 = vperm.xlu0 %2038, %v919
      %v2040 = vpop.permute.xlu0 %2039
      %2042 = vset.pattern.permute.xlu0 3
      %2043 = vperm.xlu0 %2042, %v920
      %v2044 = vpop.permute.xlu0 %2043
      %2046 = vset.pattern.permute.xlu0 3
      %2047 = vperm.xlu0 %2046, %v921
      %v2048 = vpop.permute.xlu0 %2047
      %2050 = vset.pattern.permute.xlu0 3
      %2051 = vperm.xlu0 %2050, %v922
      %v2052 = vpop.permute.xlu0 %2051
      %2054 = vset.pattern.permute.xlu0 3
      %2055 = vperm.xlu0 %2054, %v923
      %v2056 = vpop.permute.xlu0 %2055
      %2058 = vset.pattern.permute.xlu0 3
      %2059 = vperm.xlu0 %2058, %v924
      %v2060 = vpop.permute.xlu0 %2059
      %2062 = vset.pattern.permute.xlu0 3
      %2063 = vperm.xlu0 %2062, %v925
      %v2064 = vpop.permute.xlu0 %2063
      %2066 = vset.pattern.permute.xlu0 3
      %2067 = vperm.xlu0 %2066, %v926
      %v2068 = vpop.permute.xlu0 %2067
      %2070 = vset.pattern.permute.xlu0 3
      %2071 = vperm.xlu0 %2070, %v927
      %v2072 = vpop.permute.xlu0 %2071
      %2074 = vset.pattern.permute.xlu0 3
      %2075 = vperm.xlu0 %2074, %v928
      %v2076 = vpop.permute.xlu0 %2075
      %2078 = vset.pattern.permute.xlu0 3
      %2079 = vperm.xlu0 %2078, %v929
      %v2080 = vpop.permute.xlu0 %2079
      %2082 = vset.pattern.permute.xlu0 3
      %2083 = vperm.xlu0 %2082, %v930
      %v2084 = vpop.permute.xlu0 %2083
      %2086 = vset.pattern.permute.xlu0 3
      %2087 = vperm.xlu0 %2086, %v931
      %v2088 = vpop.permute.xlu0 %2087
      %2090 = vset.pattern.permute.xlu0 3
      %2091 = vperm.xlu0 %2090, %v932
      %v2092 = vpop.permute.xlu0 %2091
      %2094 = vset.pattern.permute.xlu0 3
      %2095 = vperm.xlu0 %2094, %v933
      %v2096 = vpop.permute.xlu0 %2095
      %2098 = vset.pattern.permute.xlu0 3
      %2099 = vperm.xlu0 %2098, %v934
      %v2100 = vpop.permute.xlu0 %2099
      %v2102 = vmul.f32 %v974, %v1976
      %v2103 = vmul.f32 %v975, %v1980
      %v2104 = vmul.f32 %v976, %v1984
      %v2105 = vmul.f32 %v977, %v1988
      %v2106 = vmul.f32 %v978, %v1992
      %v2107 = vmul.f32 %v979, %v1996
      %v2108 = vmul.f32 %v980, %v2000
      %v2109 = vmul.f32 %v981, %v2004
      %v2110 = vmul.f32 %v982, %v2008
      %v2111 = vmul.f32 %v983, %v2012
      %v2112 = vmul.f32 %v984, %v2016
      %v2113 = vmul.f32 %v985, %v2020
      %v2114 = vmul.f32 %v986, %v2024
      %v2115 = vmul.f32 %v987, %v2028
      %v2116 = vmul.f32 %v988, %v2032
      %v2117 = vmul.f32 %v989, %v2036
      %v2118 = vmul.f32 %v990, %v2040
      %v2119 = vmul.f32 %v991, %v2044
      %v2120 = vmul.f32 %v992, %v2048
      %v2121 = vmul.f32 %v993, %v2052
      %v2122 = vmul.f32 %v994, %v2056
      %v2123 = vmul.f32 %v995, %v2060
      %v2124 = vmul.f32 %v996, %v2064
      %v2125 = vmul.f32 %v997, %v2068
      %v2126 = vmul.f32 %v998, %v2072
      %v2127 = vmul.f32 %v999, %v2076
      %v2128 = vmul.f32 %v1000, %v2080
      %v2129 = vmul.f32 %v1001, %v2084
      %v2130 = vmul.f32 %v1002, %v2088
      %v2131 = vmul.f32 %v1003, %v2092
      %v2132 = vmul.f32 %v1004, %v2096
      %v2133 = vmul.f32 %v1005, %v2100
      %v2134 = vadd.f32 %v2102, %v1203
      %v2135 = vadd.f32 %v2103, %v1203
      %v2136 = vadd.f32 %v2104, %v1203
      %v2137 = vadd.f32 %v2105, %v1203
      %v2138 = vadd.f32 %v2106, %v1203
      %v2139 = vadd.f32 %v2107, %v1203
      %v2140 = vadd.f32 %v2108, %v1203
      %v2141 = vadd.f32 %v2109, %v1203
      %v2142 = vadd.f32 %v2110, %v1203
      %v2143 = vadd.f32 %v2111, %v1203
      %v2144 = vadd.f32 %v2112, %v1203
      %v2145 = vadd.f32 %v2113, %v1203
      %v2146 = vadd.f32 %v2114, %v1203
      %v2147 = vadd.f32 %v2115, %v1203
      %v2148 = vadd.f32 %v2116, %v1203
      %v2149 = vadd.f32 %v2117, %v1203
      %v2150 = vadd.f32 %v2118, %v1203
      %v2151 = vadd.f32 %v2119, %v1203
      %v2152 = vadd.f32 %v2120, %v1203
      %v2153 = vadd.f32 %v2121, %v1203
      %v2154 = vadd.f32 %v2122, %v1203
      %v2155 = vadd.f32 %v2123, %v1203
      %v2156 = vadd.f32 %v2124, %v1203
      %v2157 = vadd.f32 %v2125, %v1203
      %v2158 = vadd.f32 %v2126, %v1203
      %v2159 = vadd.f32 %v2127, %v1203
      %v2160 = vadd.f32 %v2128, %v1203
      %v2161 = vadd.f32 %v2129, %v1203
      %v2162 = vadd.f32 %v2130, %v1203
      %v2163 = vadd.f32 %v2131, %v1203
      %v2164 = vadd.f32 %v2132, %v1203
      %v2165 = vadd.f32 %v2133, %v1203
      %v2166 = vmax.f32 %v2134, 0.0
      %v2167 = vmax.f32 %v2135, 0.0
      %v2168 = vmax.f32 %v2136, 0.0
      %v2169 = vmax.f32 %v2137, 0.0
      %v2170 = vmax.f32 %v2138, 0.0
      %v2171 = vmax.f32 %v2139, 0.0
      %v2172 = vmax.f32 %v2140, 0.0
      %v2173 = vmax.f32 %v2141, 0.0
      %v2174 = vmax.f32 %v2142, 0.0
      %v2175 = vmax.f32 %v2143, 0.0
      %v2176 = vmax.f32 %v2144, 0.0
      %v2177 = vmax.f32 %v2145, 0.0
      %v2178 = vmax.f32 %v2146, 0.0
      %v2179 = vmax.f32 %v2147, 0.0
      %v2180 = vmax.f32 %v2148, 0.0
      %v2181 = vmax.f32 %v2149, 0.0
      %v2182 = vmax.f32 %v2150, 0.0
      %v2183 = vmax.f32 %v2151, 0.0
      %v2184 = vmax.f32 %v2152, 0.0
      %v2185 = vmax.f32 %v2153, 0.0
      %v2186 = vmax.f32 %v2154, 0.0
      %v2187 = vmax.f32 %v2155, 0.0
      %v2188 = vmax.f32 %v2156, 0.0
      %v2189 = vmax.f32 %v2157, 0.0
      %v2190 = vmax.f32 %v2158, 0.0
      %v2191 = vmax.f32 %v2159, 0.0
      %v2192 = vmax.f32 %v2160, 0.0
      %v2193 = vmax.f32 %v2161, 0.0
      %v2194 = vmax.f32 %v2162, 0.0
      %v2195 = vmax.f32 %v2163, 0.0
      %v2196 = vmax.f32 %v2164, 0.0
      %v2197 = vmax.f32 %v2165, 0.0
      %s2198 = scalar_lea.vmem %s4, 72
      %v2199 = vld [vmem:[%s2198] sm:$0xff]
      %v2200 = vld [vmem:[%s2198 + $0x8] sm:$0xff]
      %v2201 = vld [vmem:[%s2198 + $0x10] sm:$0xff]
      %v2202 = vpack.c.bf16 %v2167, %v2166
      %v2203 = vpack.c.bf16 %v2169, %v2168
      %v2204 = vpack.c.bf16 %v2171, %v2170
      %v2205 = vpack.c.bf16 %v2173, %v2172
      %v2206 = vpack.c.bf16 %v2175, %v2174
      %v2207 = vpack.c.bf16 %v2177, %v2176
      %v2208 = vpack.c.bf16 %v2179, %v2178
      %v2209 = vpack.c.bf16 %v2181, %v2180
      %v2210 = vpack.c.bf16 %v2183, %v2182
      %v2211 = vpack.c.bf16 %v2185, %v2184
      %v2212 = vpack.c.bf16 %v2187, %v2186
      %v2213 = vpack.c.bf16 %v2189, %v2188
      %v2214 = vpack.c.bf16 %v2191, %v2190
      %v2215 = vpack.c.bf16 %v2193, %v2192
      %v2216 = vpack.c.bf16 %v2195, %v2194
      %v2217 = vpack.c.bf16 %v2197, %v2196
      %v2221 = vunpack.c.l.b16 %v2199
      %v2222 = vunpack.c.h.b16 %v2199
      %v2223 = vunpack.c.l.b16 %v2200
      %v2224 = vunpack.c.h.b16 %v2200
      %v2225 = vunpack.c.l.b16 %v2201
      %v2226 = vunpack.c.h.b16 %v2201
      %v2227 = vpack.c.b16 %v2223, %v2221
      %v2228 = vpack.c.b16 %v2224, %v2222
      %v2229 = vpack.c.b16 %v2225, %v2225
      %v2230 = vpack.c.b16 %v2226, %v2226
      %2235 = vmatprep.subr.bf16.mxu0 0
      %2236 = vmatpush1.bf16.msra.mxu0 %v2202
      %2237 = vmatprep.subr.bf16.mxu0 0
      %2238 = vmatpush1.bf16.msra.mxu0 %v2203
      %2239 = vmatprep.subr.bf16.mxu0 0
      %2240 = vmatpush1.bf16.msra.mxu0 %v2204
      %2241 = vmatprep.subr.bf16.mxu0 0
      %2242 = vmatpush1.bf16.msra.mxu0 %v2205
      %2243 = vmatprep.subr.bf16.mxu0 0
      %2244 = vmatpush1.bf16.msra.mxu0 %v2206
      %2245 = vmatprep.subr.bf16.mxu0 0
      %2246 = vmatpush1.bf16.msra.mxu0 %v2207
      %2247 = vmatprep.subr.bf16.mxu0 0
      %2248 = vmatpush1.bf16.msra.mxu0 %v2208
      %2249 = vmatprep.subr.bf16.mxu0 0
      %2250 = vmatpush1.bf16.msra.mxu0 %v2209
      %2251 = vmatprep.subr.bf16.mxu0 0
      %2252 = vmatpush1.bf16.msra.mxu0 %v2210
      %2253 = vmatprep.subr.bf16.mxu0 0
      %2254 = vmatpush1.bf16.msra.mxu0 %v2211
      %2255 = vmatprep.subr.bf16.mxu0 0
      %2256 = vmatpush1.bf16.msra.mxu0 %v2212
      %2257 = vmatprep.subr.bf16.mxu0 0
      %2258 = vmatpush1.bf16.msra.mxu0 %v2213
      %2259 = vmatprep.subr.bf16.mxu0 0
      %2260 = vmatpush1.bf16.msra.mxu0 %v2214
      %2261 = vmatprep.subr.bf16.mxu0 0
      %2262 = vmatpush1.bf16.msra.mxu0 %v2215
      %2263 = vmatprep.subr.bf16.mxu0 0
      %2264 = vmatpush1.bf16.msra.mxu0 %v2216
      %2265 = vmatprep.subr.bf16.mxu0 0
      %2266 = vmatpush1.bf16.msra.mxu0 %v2217
      %2267 = vmatprep.mubr.bf16.mxu0 %v2228
      %2268 = vmatmul.mubr.bf16.gmra.mrb[0].mxu0 %v2227
      %v2269 = vpop.f32.mrb[0].mxu0
      %v2270 = vadd.f32 0.0, %v2269
      %v2271 = vpop.f32.mrb[0].mxu0
      %v2272 = vpop.f32.mrb[0].mxu0
      %v2273 = vadd.f32 0.0, %v2272
      %v2274 = vpop.f32.mrb[0].mxu0
      %2275 = vmatprep.mubr.bf16.mxu0 %v2230
      %2276 = vmatmul.mubr.bf16.gmra.mrb[0].mxu0 %v2229
      %v2277 = vpop.f32.mrb[0].mxu0
      %v2278 = vadd.f32 0.0, %v2277
      %v2279 = vpop.f32.mrb[0].mxu0
      %v2280 = vpop.f32.mrb[0].mxu0
      %v2281 = vpop.f32.mrb[0].mxu0
      %2282 = vdwg.mxu0
      %v2283 = vadd.f32 %v1971, %v2270
      %v2284 = vadd.f32 %v1972, %v2273
      %v2285 = vadd.f32 %v1973, %v2278
      %2286 = vset.pattern.permute.xlu0 4
      %2287 = vperm.xlu0 %2286, %v903
      %v2288 = vpop.permute.xlu0 %2287
      %2290 = vset.pattern.permute.xlu0 4
      %2291 = vperm.xlu0 %2290, %v904
      %v2292 = vpop.permute.xlu0 %2291
      %2294 = vset.pattern.permute.xlu0 4
      %2295 = vperm.xlu0 %2294, %v905
      %v2296 = vpop.permute.xlu0 %2295
      %2298 = vset.pattern.permute.xlu0 4
      %2299 = vperm.xlu0 %2298, %v906
      %v2300 = vpop.permute.xlu0 %2299
      %2302 = vset.pattern.permute.xlu0 4
      %2303 = vperm.xlu0 %2302, %v907
      %v2304 = vpop.permute.xlu0 %2303
      %2306 = vset.pattern.permute.xlu0 4
      %2307 = vperm.xlu0 %2306, %v908
      %v2308 = vpop.permute.xlu0 %2307
      %2310 = vset.pattern.permute.xlu0 4
      %2311 = vperm.xlu0 %2310, %v909
      %v2312 = vpop.permute.xlu0 %2311
      %2314 = vset.pattern.permute.xlu0 4
      %2315 = vperm.xlu0 %2314, %v910
      %v2316 = vpop.permute.xlu0 %2315
      %2318 = vset.pattern.permute.xlu0 4
      %2319 = vperm.xlu0 %2318, %v911
      %v2320 = vpop.permute.xlu0 %2319
      %2322 = vset.pattern.permute.xlu0 4
      %2323 = vperm.xlu0 %2322, %v912
      %v2324 = vpop.permute.xlu0 %2323
      %2326 = vset.pattern.permute.xlu0 4
      %2327 = vperm.xlu0 %2326, %v913
      %v2328 = vpop.permute.xlu0 %2327
      %2330 = vset.pattern.permute.xlu0 4
      %2331 = vperm.xlu0 %2330, %v914
      %v2332 = vpop.permute.xlu0 %2331
      %2334 = vset.pattern.permute.xlu0 4
      %2335 = vperm.xlu0 %2334, %v915
      %v2336 = vpop.permute.xlu0 %2335
      %2338 = vset.pattern.permute.xlu0 4
      %2339 = vperm.xlu0 %2338, %v916
      %v2340 = vpop.permute.xlu0 %2339
      %2342 = vset.pattern.permute.xlu0 4
      %2343 = vperm.xlu0 %2342, %v917
      %v2344 = vpop.permute.xlu0 %2343
      %2346 = vset.pattern.permute.xlu0 4
      %2347 = vperm.xlu0 %2346, %v918
      %v2348 = vpop.permute.xlu0 %2347
      %2350 = vset.pattern.permute.xlu0 4
      %2351 = vperm.xlu0 %2350, %v919
      %v2352 = vpop.permute.xlu0 %2351
      %2354 = vset.pattern.permute.xlu0 4
      %2355 = vperm.xlu0 %2354, %v920
      %v2356 = vpop.permute.xlu0 %2355
      %2358 = vset.pattern.permute.xlu0 4
      %2359 = vperm.xlu0 %2358, %v921
      %v2360 = vpop.permute.xlu0 %2359
      %2362 = vset.pattern.permute.xlu0 4
      %2363 = vperm.xlu0 %2362, %v922
      %v2364 = vpop.permute.xlu0 %2363
      %2366 = vset.pattern.permute.xlu0 4
      %2367 = vperm.xlu0 %2366, %v923
      %v2368 = vpop.permute.xlu0 %2367
      %2370 = vset.pattern.permute.xlu0 4
      %2371 = vperm.xlu0 %2370, %v924
      %v2372 = vpop.permute.xlu0 %2371
      %2374 = vset.pattern.permute.xlu0 4
      %2375 = vperm.xlu0 %2374, %v925
      %v2376 = vpop.permute.xlu0 %2375
      %2378 = vset.pattern.permute.xlu0 4
      %2379 = vperm.xlu0 %2378, %v926
      %v2380 = vpop.permute.xlu0 %2379
      %2382 = vset.pattern.permute.xlu0 4
      %2383 = vperm.xlu0 %2382, %v927
      %v2384 = vpop.permute.xlu0 %2383
      %2386 = vset.pattern.permute.xlu0 4
      %2387 = vperm.xlu0 %2386, %v928
      %v2388 = vpop.permute.xlu0 %2387
      %2390 = vset.pattern.permute.xlu0 4
      %2391 = vperm.xlu0 %2390, %v929
      %v2392 = vpop.permute.xlu0 %2391
      %2394 = vset.pattern.permute.xlu0 4
      %2395 = vperm.xlu0 %2394, %v930
      %v2396 = vpop.permute.xlu0 %2395
      %2398 = vset.pattern.permute.xlu0 4
      %2399 = vperm.xlu0 %2398, %v931
      %v2400 = vpop.permute.xlu0 %2399
      %2402 = vset.pattern.permute.xlu0 4
      %2403 = vperm.xlu0 %2402, %v932
      %v2404 = vpop.permute.xlu0 %2403
      %2406 = vset.pattern.permute.xlu0 4
      %2407 = vperm.xlu0 %2406, %v933
      %v2408 = vpop.permute.xlu0 %2407
      %2410 = vset.pattern.permute.xlu0 4
      %2411 = vperm.xlu0 %2410, %v934
      %v2412 = vpop.permute.xlu0 %2411
      %v2414 = vmul.f32 %v974, %v2288
      %v2415 = vmul.f32 %v975, %v2292
      %v2416 = vmul.f32 %v976, %v2296
      %v2417 = vmul.f32 %v977, %v2300
      %v2418 = vmul.f32 %v978, %v2304
      %v2419 = vmul.f32 %v979, %v2308
      %v2420 = vmul.f32 %v980, %v2312
      %v2421 = vmul.f32 %v981, %v2316
      %v2422 = vmul.f32 %v982, %v2320
      %v2423 = vmul.f32 %v983, %v2324
      %v2424 = vmul.f32 %v984, %v2328
      %v2425 = vmul.f32 %v985, %v2332
      %v2426 = vmul.f32 %v986, %v2336
      %v2427 = vmul.f32 %v987, %v2340
      %v2428 = vmul.f32 %v988, %v2344
      %v2429 = vmul.f32 %v989, %v2348
      %v2430 = vmul.f32 %v990, %v2352
      %v2431 = vmul.f32 %v991, %v2356
      %v2432 = vmul.f32 %v992, %v2360
      %v2433 = vmul.f32 %v993, %v2364
      %v2434 = vmul.f32 %v994, %v2368
      %v2435 = vmul.f32 %v995, %v2372
      %v2436 = vmul.f32 %v996, %v2376
      %v2437 = vmul.f32 %v997, %v2380
      %v2438 = vmul.f32 %v998, %v2384
      %v2439 = vmul.f32 %v999, %v2388
      %v2440 = vmul.f32 %v1000, %v2392
      %v2441 = vmul.f32 %v1001, %v2396
      %v2442 = vmul.f32 %v1002, %v2400
      %v2443 = vmul.f32 %v1003, %v2404
      %v2444 = vmul.f32 %v1004, %v2408
      %v2445 = vmul.f32 %v1005, %v2412
      %v2446 = vadd.f32 %v2414, %v1203
      %v2447 = vadd.f32 %v2415, %v1203
      %v2448 = vadd.f32 %v2416, %v1203
      %v2449 = vadd.f32 %v2417, %v1203
      %v2450 = vadd.f32 %v2418, %v1203
      %v2451 = vadd.f32 %v2419, %v1203
      %v2452 = vadd.f32 %v2420, %v1203
      %v2453 = vadd.f32 %v2421, %v1203
      %v2454 = vadd.f32 %v2422, %v1203
      %v2455 = vadd.f32 %v2423, %v1203
      %v2456 = vadd.f32 %v2424, %v1203
      %v2457 = vadd.f32 %v2425, %v1203
      %v2458 = vadd.f32 %v2426, %v1203
      %v2459 = vadd.f32 %v2427, %v1203
      %v2460 = vadd.f32 %v2428, %v1203
      %v2461 = vadd.f32 %v2429, %v1203
      %v2462 = vadd.f32 %v2430, %v1203
      %v2463 = vadd.f32 %v2431, %v1203
      %v2464 = vadd.f32 %v2432, %v1203
      %v2465 = vadd.f32 %v2433, %v1203
      %v2466 = vadd.f32 %v2434, %v1203
      %v2467 = vadd.f32 %v2435, %v1203
      %v2468 = vadd.f32 %v2436, %v1203
      %v2469 = vadd.f32 %v2437, %v1203
      %v2470 = vadd.f32 %v2438, %v1203
      %v2471 = vadd.f32 %v2439, %v1203
      %v2472 = vadd.f32 %v2440, %v1203
      %v2473 = vadd.f32 %v2441, %v1203
      %v2474 = vadd.f32 %v2442, %v1203
      %v2475 = vadd.f32 %v2443, %v1203
      %v2476 = vadd.f32 %v2444, %v1203
      %v2477 = vadd.f32 %v2445, %v1203
      %v2478 = vmax.f32 %v2446, 0.0
      %v2479 = vmax.f32 %v2447, 0.0
      %v2480 = vmax.f32 %v2448, 0.0
      %v2481 = vmax.f32 %v2449, 0.0
      %v2482 = vmax.f32 %v2450, 0.0
      %v2483 = vmax.f32 %v2451, 0.0
      %v2484 = vmax.f32 %v2452, 0.0
      %v2485 = vmax.f32 %v2453, 0.0
      %v2486 = vmax.f32 %v2454, 0.0
      %v2487 = vmax.f32 %v2455, 0.0
      %v2488 = vmax.f32 %v2456, 0.0
      %v2489 = vmax.f32 %v2457, 0.0
      %v2490 = vmax.f32 %v2458, 0.0
      %v2491 = vmax.f32 %v2459, 0.0
      %v2492 = vmax.f32 %v2460, 0.0
      %v2493 = vmax.f32 %v2461, 0.0
      %v2494 = vmax.f32 %v2462, 0.0
      %v2495 = vmax.f32 %v2463, 0.0
      %v2496 = vmax.f32 %v2464, 0.0
      %v2497 = vmax.f32 %v2465, 0.0
      %v2498 = vmax.f32 %v2466, 0.0
      %v2499 = vmax.f32 %v2467, 0.0
      %v2500 = vmax.f32 %v2468, 0.0
      %v2501 = vmax.f32 %v2469, 0.0
      %v2502 = vmax.f32 %v2470, 0.0
      %v2503 = vmax.f32 %v2471, 0.0
      %v2504 = vmax.f32 %v2472, 0.0
      %v2505 = vmax.f32 %v2473, 0.0
      %v2506 = vmax.f32 %v2474, 0.0
      %v2507 = vmax.f32 %v2475, 0.0
      %v2508 = vmax.f32 %v2476, 0.0
      %v2509 = vmax.f32 %v2477, 0.0
      %s2510 = scalar_lea.vmem %s4, 96
      %v2511 = vld [vmem:[%s2510] sm:$0xff]
      %v2512 = vld [vmem:[%s2510 + $0x8] sm:$0xff]
      %v2513 = vld [vmem:[%s2510 + $0x10] sm:$0xff]
      %v2514 = vpack.c.bf16 %v2479, %v2478
      %v2515 = vpack.c.bf16 %v2481, %v2480
      %v2516 = vpack.c.bf16 %v2483, %v2482
      %v2517 = vpack.c.bf16 %v2485, %v2484
      %v2518 = vpack.c.bf16 %v2487, %v2486
      %v2519 = vpack.c.bf16 %v2489, %v2488
      %v2520 = vpack.c.bf16 %v2491, %v2490
      %v2521 = vpack.c.bf16 %v2493, %v2492
      %v2522 = vpack.c.bf16 %v2495, %v2494
      %v2523 = vpack.c.bf16 %v2497, %v2496
      %v2524 = vpack.c.bf16 %v2499, %v2498
      %v2525 = vpack.c.bf16 %v2501, %v2500
      %v2526 = vpack.c.bf16 %v2503, %v2502
      %v2527 = vpack.c.bf16 %v2505, %v2504
      %v2528 = vpack.c.bf16 %v2507, %v2506
      %v2529 = vpack.c.bf16 %v2509, %v2508
      %v2533 = vunpack.c.l.b16 %v2511
      %v2534 = vunpack.c.h.b16 %v2511
      %v2535 = vunpack.c.l.b16 %v2512
      %v2536 = vunpack.c.h.b16 %v2512
      %v2537 = vunpack.c.l.b16 %v2513
      %v2538 = vunpack.c.h.b16 %v2513
      %v2539 = vpack.c.b16 %v2535, %v2533
      %v2540 = vpack.c.b16 %v2536, %v2534
      %v2541 = vpack.c.b16 %v2537, %v2537
      %v2542 = vpack.c.b16 %v2538, %v2538
      %2547 = vmatprep.subr.bf16.mxu0 0
      %2548 = vmatpush1.bf16.msra.mxu0 %v2514
      %2549 = vmatprep.subr.bf16.mxu0 0
      %2550 = vmatpush1.bf16.msra.mxu0 %v2515
      %2551 = vmatprep.subr.bf16.mxu0 0
      %2552 = vmatpush1.bf16.msra.mxu0 %v2516
      %2553 = vmatprep.subr.bf16.mxu0 0
      %2554 = vmatpush1.bf16.msra.mxu0 %v2517
      %2555 = vmatprep.subr.bf16.mxu0 0
      %2556 = vmatpush1.bf16.msra.mxu0 %v2518
      %2557 = vmatprep.subr.bf16.mxu0 0
      %2558 = vmatpush1.bf16.msra.mxu0 %v2519
      %2559 = vmatprep.subr.bf16.mxu0 0
      %2560 = vmatpush1.bf16.msra.mxu0 %v2520
      %2561 = vmatprep.subr.bf16.mxu0 0
      %2562 = vmatpush1.bf16.msra.mxu0 %v2521
      %2563 = vmatprep.subr.bf16.mxu0 0
      %2564 = vmatpush1.bf16.msra.mxu0 %v2522
      %2565 = vmatprep.subr.bf16.mxu0 0
      %2566 = vmatpush1.bf16.msra.mxu0 %v2523
      %2567 = vmatprep.subr.bf16.mxu0 0
      %2568 = vmatpush1.bf16.msra.mxu0 %v2524
      %2569 = vmatprep.subr.bf16.mxu0 0
      %2570 = vmatpush1.bf16.msra.mxu0 %v2525
      %2571 = vmatprep.subr.bf16.mxu0 0
      %2572 = vmatpush1.bf16.msra.mxu0 %v2526
      %2573 = vmatprep.subr.bf16.mxu0 0
      %2574 = vmatpush1.bf16.msra.mxu0 %v2527
      %2575 = vmatprep.subr.bf16.mxu0 0
      %2576 = vmatpush1.bf16.msra.mxu0 %v2528
      %2577 = vmatprep.subr.bf16.mxu0 0
      %2578 = vmatpush1.bf16.msra.mxu0 %v2529
      %2579 = vmatprep.mubr.bf16.mxu0 %v2540
      %2580 = vmatmul.mubr.bf16.gmra.mrb[0].mxu0 %v2539
      %v2581 = vpop.f32.mrb[0].mxu0
      %v2582 = vadd.f32 0.0, %v2581
      %v2583 = vpop.f32.mrb[0].mxu0
      %v2584 = vpop.f32.mrb[0].mxu0
      %v2585 = vadd.f32 0.0, %v2584
      %v2586 = vpop.f32.mrb[0].mxu0
      %2587 = vmatprep.mubr.bf16.mxu0 %v2542
      %2588 = vmatmul.mubr.bf16.gmra.mrb[0].mxu0 %v2541
      %v2589 = vpop.f32.mrb[0].mxu0
      %v2590 = vadd.f32 0.0, %v2589
      %v2591 = vpop.f32.mrb[0].mxu0
      %v2592 = vpop.f32.mrb[0].mxu0
      %v2593 = vpop.f32.mrb[0].mxu0
      %2594 = vdwg.mxu0
      %v2595 = vadd.f32 %v2283, %v2582
      %v2596 = vadd.f32 %v2284, %v2585
      %v2597 = vadd.f32 %v2285, %v2590
      %2598 = vset.pattern.permute.xlu0 5
      %2599 = vperm.xlu0 %2598, %v903
      %v2600 = vpop.permute.xlu0 %2599
      %2602 = vset.pattern.permute.xlu0 5
      %2603 = vperm.xlu0 %2602, %v904
      %v2604 = vpop.permute.xlu0 %2603
      %2606 = vset.pattern.permute.xlu0 5
      %2607 = vperm.xlu0 %2606, %v905
      %v2608 = vpop.permute.xlu0 %2607
      %2610 = vset.pattern.permute.xlu0 5
      %2611 = vperm.xlu0 %2610, %v906
      %v2612 = vpop.permute.xlu0 %2611
      %2614 = vset.pattern.permute.xlu0 5
      %2615 = vperm.xlu0 %2614, %v907
      %v2616 = vpop.permute.xlu0 %2615
      %2618 = vset.pattern.permute.xlu0 5
      %2619 = vperm.xlu0 %2618, %v908
      %v2620 = vpop.permute.xlu0 %2619
      %2622 = vset.pattern.permute.xlu0 5
      %2623 = vperm.xlu0 %2622, %v909
      %v2624 = vpop.permute.xlu0 %2623
      %2626 = vset.pattern.permute.xlu0 5
      %2627 = vperm.xlu0 %2626, %v910
      %v2628 = vpop.permute.xlu0 %2627
      %2630 = vset.pattern.permute.xlu0 5
      %2631 = vperm.xlu0 %2630, %v911
      %v2632 = vpop.permute.xlu0 %2631
      %2634 = vset.pattern.permute.xlu0 5
      %2635 = vperm.xlu0 %2634, %v912
      %v2636 = vpop.permute.xlu0 %2635
      %2638 = vset.pattern.permute.xlu0 5
      %2639 = vperm.xlu0 %2638, %v913
      %v2640 = vpop.permute.xlu0 %2639
      %2642 = vset.pattern.permute.xlu0 5
      %2643 = vperm.xlu0 %2642, %v914
      %v2644 = vpop.permute.xlu0 %2643
      %2646 = vset.pattern.permute.xlu0 5
      %2647 = vperm.xlu0 %2646, %v915
      %v2648 = vpop.permute.xlu0 %2647
      %2650 = vset.pattern.permute.xlu0 5
      %2651 = vperm.xlu0 %2650, %v916
      %v2652 = vpop.permute.xlu0 %2651
      %2654 = vset.pattern.permute.xlu0 5
      %2655 = vperm.xlu0 %2654, %v917
      %v2656 = vpop.permute.xlu0 %2655
      %2658 = vset.pattern.permute.xlu0 5
      %2659 = vperm.xlu0 %2658, %v918
      %v2660 = vpop.permute.xlu0 %2659
      %2662 = vset.pattern.permute.xlu0 5
      %2663 = vperm.xlu0 %2662, %v919
      %v2664 = vpop.permute.xlu0 %2663
      %2666 = vset.pattern.permute.xlu0 5
      %2667 = vperm.xlu0 %2666, %v920
      %v2668 = vpop.permute.xlu0 %2667
      %2670 = vset.pattern.permute.xlu0 5
      %2671 = vperm.xlu0 %2670, %v921
      %v2672 = vpop.permute.xlu0 %2671
      %2674 = vset.pattern.permute.xlu0 5
      %2675 = vperm.xlu0 %2674, %v922
      %v2676 = vpop.permute.xlu0 %2675
      %2678 = vset.pattern.permute.xlu0 5
      %2679 = vperm.xlu0 %2678, %v923
      %v2680 = vpop.permute.xlu0 %2679
      %2682 = vset.pattern.permute.xlu0 5
      %2683 = vperm.xlu0 %2682, %v924
      %v2684 = vpop.permute.xlu0 %2683
      %2686 = vset.pattern.permute.xlu0 5
      %2687 = vperm.xlu0 %2686, %v925
      %v2688 = vpop.permute.xlu0 %2687
      %2690 = vset.pattern.permute.xlu0 5
      %2691 = vperm.xlu0 %2690, %v926
      %v2692 = vpop.permute.xlu0 %2691
      %2694 = vset.pattern.permute.xlu0 5
      %2695 = vperm.xlu0 %2694, %v927
      %v2696 = vpop.permute.xlu0 %2695
      %2698 = vset.pattern.permute.xlu0 5
      %2699 = vperm.xlu0 %2698, %v928
      %v2700 = vpop.permute.xlu0 %2699
      %2702 = vset.pattern.permute.xlu0 5
      %2703 = vperm.xlu0 %2702, %v929
      %v2704 = vpop.permute.xlu0 %2703
      %2706 = vset.pattern.permute.xlu0 5
      %2707 = vperm.xlu0 %2706, %v930
      %v2708 = vpop.permute.xlu0 %2707
      %2710 = vset.pattern.permute.xlu0 5
      %2711 = vperm.xlu0 %2710, %v931
      %v2712 = vpop.permute.xlu0 %2711
      %2714 = vset.pattern.permute.xlu0 5
      %2715 = vperm.xlu0 %2714, %v932
      %v2716 = vpop.permute.xlu0 %2715
      %2718 = vset.pattern.permute.xlu0 5
      %2719 = vperm.xlu0 %2718, %v933
      %v2720 = vpop.permute.xlu0 %2719
      %2722 = vset.pattern.permute.xlu0 5
      %2723 = vperm.xlu0 %2722, %v934
      %v2724 = vpop.permute.xlu0 %2723
      %v2726 = vmul.f32 %v974, %v2600
      %v2727 = vmul.f32 %v975, %v2604
      %v2728 = vmul.f32 %v976, %v2608
      %v2729 = vmul.f32 %v977, %v2612
      %v2730 = vmul.f32 %v978, %v2616
      %v2731 = vmul.f32 %v979, %v2620
      %v2732 = vmul.f32 %v980, %v2624
      %v2733 = vmul.f32 %v981, %v2628
      %v2734 = vmul.f32 %v982, %v2632
      %v2735 = vmul.f32 %v983, %v2636
      %v2736 = vmul.f32 %v984, %v2640
      %v2737 = vmul.f32 %v985, %v2644
      %v2738 = vmul.f32 %v986, %v2648
      %v2739 = vmul.f32 %v987, %v2652
      %v2740 = vmul.f32 %v988, %v2656
      %v2741 = vmul.f32 %v989, %v2660
      %v2742 = vmul.f32 %v990, %v2664
      %v2743 = vmul.f32 %v991, %v2668
      %v2744 = vmul.f32 %v992, %v2672
      %v2745 = vmul.f32 %v993, %v2676
      %v2746 = vmul.f32 %v994, %v2680
      %v2747 = vmul.f32 %v995, %v2684
      %v2748 = vmul.f32 %v996, %v2688
      %v2749 = vmul.f32 %v997, %v2692
      %v2750 = vmul.f32 %v998, %v2696
      %v2751 = vmul.f32 %v999, %v2700
      %v2752 = vmul.f32 %v1000, %v2704
      %v2753 = vmul.f32 %v1001, %v2708
      %v2754 = vmul.f32 %v1002, %v2712
      %v2755 = vmul.f32 %v1003, %v2716
      %v2756 = vmul.f32 %v1004, %v2720
      %v2757 = vmul.f32 %v1005, %v2724
      %v2758 = vadd.f32 %v2726, %v1203
      %v2759 = vadd.f32 %v2727, %v1203
      %v2760 = vadd.f32 %v2728, %v1203
      %v2761 = vadd.f32 %v2729, %v1203
      %v2762 = vadd.f32 %v2730, %v1203
      %v2763 = vadd.f32 %v2731, %v1203
      %v2764 = vadd.f32 %v2732, %v1203
      %v2765 = vadd.f32 %v2733, %v1203
      %v2766 = vadd.f32 %v2734, %v1203
      %v2767 = vadd.f32 %v2735, %v1203
      %v2768 = vadd.f32 %v2736, %v1203
      %v2769 = vadd.f32 %v2737, %v1203
      %v2770 = vadd.f32 %v2738, %v1203
      %v2771 = vadd.f32 %v2739, %v1203
      %v2772 = vadd.f32 %v2740, %v1203
      %v2773 = vadd.f32 %v2741, %v1203
      %v2774 = vadd.f32 %v2742, %v1203
      %v2775 = vadd.f32 %v2743, %v1203
      %v2776 = vadd.f32 %v2744, %v1203
      %v2777 = vadd.f32 %v2745, %v1203
      %v2778 = vadd.f32 %v2746, %v1203
      %v2779 = vadd.f32 %v2747, %v1203
      %v2780 = vadd.f32 %v2748, %v1203
      %v2781 = vadd.f32 %v2749, %v1203
      %v2782 = vadd.f32 %v2750, %v1203
      %v2783 = vadd.f32 %v2751, %v1203
      %v2784 = vadd.f32 %v2752, %v1203
      %v2785 = vadd.f32 %v2753, %v1203
      %v2786 = vadd.f32 %v2754, %v1203
      %v2787 = vadd.f32 %v2755, %v1203
      %v2788 = vadd.f32 %v2756, %v1203
      %v2789 = vadd.f32 %v2757, %v1203
      %v2790 = vmax.f32 %v2758, 0.0
      %v2791 = vmax.f32 %v2759, 0.0
      %v2792 = vmax.f32 %v2760, 0.0
      %v2793 = vmax.f32 %v2761, 0.0
      %v2794 = vmax.f32 %v2762, 0.0
      %v2795 = vmax.f32 %v2763, 0.0
      %v2796 = vmax.f32 %v2764, 0.0
      %v2797 = vmax.f32 %v2765, 0.0
      %v2798 = vmax.f32 %v2766, 0.0
      %v2799 = vmax.f32 %v2767, 0.0
      %v2800 = vmax.f32 %v2768, 0.0
      %v2801 = vmax.f32 %v2769, 0.0
      %v2802 = vmax.f32 %v2770, 0.0
      %v2803 = vmax.f32 %v2771, 0.0
      %v2804 = vmax.f32 %v2772, 0.0
      %v2805 = vmax.f32 %v2773, 0.0
      %v2806 = vmax.f32 %v2774, 0.0
      %v2807 = vmax.f32 %v2775, 0.0
      %v2808 = vmax.f32 %v2776, 0.0
      %v2809 = vmax.f32 %v2777, 0.0
      %v2810 = vmax.f32 %v2778, 0.0
      %v2811 = vmax.f32 %v2779, 0.0
      %v2812 = vmax.f32 %v2780, 0.0
      %v2813 = vmax.f32 %v2781, 0.0
      %v2814 = vmax.f32 %v2782, 0.0
      %v2815 = vmax.f32 %v2783, 0.0
      %v2816 = vmax.f32 %v2784, 0.0
      %v2817 = vmax.f32 %v2785, 0.0
      %v2818 = vmax.f32 %v2786, 0.0
      %v2819 = vmax.f32 %v2787, 0.0
      %v2820 = vmax.f32 %v2788, 0.0
      %v2821 = vmax.f32 %v2789, 0.0
      %s2822 = scalar_lea.vmem %s4, 120
      %v2823 = vld [vmem:[%s2822] sm:$0xff]
      %v2824 = vld [vmem:[%s2822 + $0x8] sm:$0xff]
      %v2825 = vld [vmem:[%s2822 + $0x10] sm:$0xff]
      %v2826 = vpack.c.bf16 %v2791, %v2790
      %v2827 = vpack.c.bf16 %v2793, %v2792
      %v2828 = vpack.c.bf16 %v2795, %v2794
      %v2829 = vpack.c.bf16 %v2797, %v2796
      %v2830 = vpack.c.bf16 %v2799, %v2798
      %v2831 = vpack.c.bf16 %v2801, %v2800
      %v2832 = vpack.c.bf16 %v2803, %v2802
      %v2833 = vpack.c.bf16 %v2805, %v2804
      %v2834 = vpack.c.bf16 %v2807, %v2806
      %v2835 = vpack.c.bf16 %v2809, %v2808
      %v2836 = vpack.c.bf16 %v2811, %v2810
      %v2837 = vpack.c.bf16 %v2813, %v2812
      %v2838 = vpack.c.bf16 %v2815, %v2814
      %v2839 = vpack.c.bf16 %v2817, %v2816
      %v2840 = vpack.c.bf16 %v2819, %v2818
      %v2841 = vpack.c.bf16 %v2821, %v2820
      %v2845 = vunpack.c.l.b16 %v2823
      %v2846 = vunpack.c.h.b16 %v2823
      %v2847 = vunpack.c.l.b16 %v2824
      %v2848 = vunpack.c.h.b16 %v2824
      %v2849 = vunpack.c.l.b16 %v2825
      %v2850 = vunpack.c.h.b16 %v2825
      %v2851 = vpack.c.b16 %v2847, %v2845
      %v2852 = vpack.c.b16 %v2848, %v2846
      %v2853 = vpack.c.b16 %v2849, %v2849
      %v2854 = vpack.c.b16 %v2850, %v2850
      %2859 = vmatprep.subr.bf16.mxu0 0
      %2860 = vmatpush1.bf16.msra.mxu0 %v2826
      %2861 = vmatprep.subr.bf16.mxu0 0
      %2862 = vmatpush1.bf16.msra.mxu0 %v2827
      %2863 = vmatprep.subr.bf16.mxu0 0
      %2864 = vmatpush1.bf16.msra.mxu0 %v2828
      %2865 = vmatprep.subr.bf16.mxu0 0
      %2866 = vmatpush1.bf16.msra.mxu0 %v2829
      %2867 = vmatprep.subr.bf16.mxu0 0
      %2868 = vmatpush1.bf16.msra.mxu0 %v2830
      %2869 = vmatprep.subr.bf16.mxu0 0
      %2870 = vmatpush1.bf16.msra.mxu0 %v2831
      %2871 = vmatprep.subr.bf16.mxu0 0
      %2872 = vmatpush1.bf16.msra.mxu0 %v2832
      %2873 = vmatprep.subr.bf16.mxu0 0
      %2874 = vmatpush1.bf16.msra.mxu0 %v2833
      %2875 = vmatprep.subr.bf16.mxu0 0
      %2876 = vmatpush1.bf16.msra.mxu0 %v2834
      %2877 = vmatprep.subr.bf16.mxu0 0
      %2878 = vmatpush1.bf16.msra.mxu0 %v2835
      %2879 = vmatprep.subr.bf16.mxu0 0
      %2880 = vmatpush1.bf16.msra.mxu0 %v2836
      %2881 = vmatprep.subr.bf16.mxu0 0
      %2882 = vmatpush1.bf16.msra.mxu0 %v2837
      %2883 = vmatprep.subr.bf16.mxu0 0
      %2884 = vmatpush1.bf16.msra.mxu0 %v2838
      %2885 = vmatprep.subr.bf16.mxu0 0
      %2886 = vmatpush1.bf16.msra.mxu0 %v2839
      %2887 = vmatprep.subr.bf16.mxu0 0
      %2888 = vmatpush1.bf16.msra.mxu0 %v2840
      %2889 = vmatprep.subr.bf16.mxu0 0
      %2890 = vmatpush1.bf16.msra.mxu0 %v2841
      %2891 = vmatprep.mubr.bf16.mxu0 %v2852
      %2892 = vmatmul.mubr.bf16.gmra.mrb[0].mxu0 %v2851
      %v2893 = vpop.f32.mrb[0].mxu0
      %v2894 = vadd.f32 0.0, %v2893
      %v2895 = vpop.f32.mrb[0].mxu0
      %v2896 = vpop.f32.mrb[0].mxu0
      %v2897 = vadd.f32 0.0, %v2896
      %v2898 = vpop.f32.mrb[0].mxu0
      %2899 = vmatprep.mubr.bf16.mxu0 %v2854
      %2900 = vmatmul.mubr.bf16.gmra.mrb[0].mxu0 %v2853
      %v2901 = vpop.f32.mrb[0].mxu0
      %v2902 = vadd.f32 0.0, %v2901
      %v2903 = vpop.f32.mrb[0].mxu0
      %v2904 = vpop.f32.mrb[0].mxu0
      %v2905 = vpop.f32.mrb[0].mxu0
      %2906 = vdwg.mxu0
      %v2907 = vadd.f32 %v2595, %v2894
      %v2908 = vadd.f32 %v2596, %v2897
      %v2909 = vadd.f32 %v2597, %v2902
      %v2910 = vmul.f32 %v2907, 0.015625
      %v2911 = vmul.f32 %v2908, 0.015625
      %v2912 = vmul.f32 %v2909, 0.015625
      %2913 = vst [vmem:[%s226] sm:$0xff] %v2910
      %2914 = vst [vmem:[%s226 + $0x8] sm:$0xff] %v2911
      %2915 = vst [vmem:[%s226 + $0x10] sm:$0xff] %v2912
      %s2916 = smul.u32 3, %s16
      %p2917 = scmp.lt.s32.totalorder %s2916, 5
      %s2918 = scalar_select %p2917, %s2916, 5
      %s2919 = smul.addr %s2918, 8
      %s2920 = scalar_lea.vmem %s5, %s2919
      // Predicated region
      $region41: #{rpp_forward.1} parent=39 // pred_check
        %p2921 = pneg %p144
      $region42: #{rpp_forward.1} parent=39 // pred_check_branch
        %2923 = sbr.rel (%p2921) target = $region44
      $region43: #{rpp_forward.1} parent=39 // pred_region
        %s2924 = smul.u32 3, %s16
      $region44: #{rpp_forward.1} parent=39 // pred_fallthru
        _
    $region40: #{rpp_forward.1} parent=5 // pred_fallthru
      _
    %p2925 = scmp.le.s32.totalorder 2, %s11
    // Predicated region
    $region45: #{rpp_forward.1} parent=5 // pred_check
      %p2926 = pneg %p2925
    $region46: #{rpp_forward.1} parent=5 // pred_check_branch
      %2928 = sbr.rel (%p2926) target = $region48
    $region47: #{rpp_forward.1} parent=5 // pred_region
      %s2929 = ssub.s32 %s11, 2
      // Predicated region
      $region49: #{rpp_forward.1} parent=47 // pred_check
        %p2930 = pneg %p150
      $region50: #{rpp_forward.1} parent=47 // pred_check_branch
        %2932 = sbr.rel (%p2930) target = $region52
      $region51: #{rpp_forward.1} parent=47 // pred_region
        %s2933 = smul.u32 3, %s17
        %p2934 = scmp.lt.s32.totalorder %s2933, 5
        %s2935 = scalar_select %p2934, %s2933, 5
        %s2936 = smul.addr %s2935, 8
        %s2937 = scalar_lea.vmem %s5, %s2936
      $region52: #{rpp_forward.1} parent=47 // pred_fallthru
        _
    $region48: #{rpp_forward.1} parent=5 // pred_fallthru
      _
  $region6: #{rpp_forward.1} parent=0 // loop_footer
    %s15 = sadd.s32 1, %s11
  $region7: #{rpp_forward.1} parent=0 // loop_footer_branch
    %10 = sbr.rel target = $region3
  $region8: #{rpp_forward.1} parent=0 // loop_exit
    _

</llo_original>
